<compile_context>
chip_gen: v7x
topology: tpu7x:2x2x1
jax: 0.10.0
libtpu: 0.0.40
codegen_flags: <defaults>
</compile_context>

<pallas_src>
import functools
import math

import jax
import jax.numpy as jnp
from jax.experimental import pallas as pl
from jax.experimental.pallas import tpu as pltpu


_INV_SQRT2 = 1.0 / math.sqrt(2.0)
_LN_EPS = 1e-12


def _mlm_head_kernel(x_ref, w_ref, b_ref, gamma_ref, beta_ref,
                     dec_ref, dbias_ref, o_ref, t_ref):
    # x_ref:     (tm, H)   input row tile
    # w_ref:     (H,  H)   dense weight, (in, out) layout
    # b_ref:     (1,  H)   dense bias
    # gamma_ref: (1,  H)   LayerNorm weight
    # beta_ref:  (1,  H)   LayerNorm bias
    # dec_ref:   (H, tn)   decoder (tied embedding^T) column tile
    # dbias_ref: (1, tn)   decoder bias tile
    # o_ref:     (tm, tn)  output score tile
    # t_ref:     (tm, H)   VMEM scratch (decoder dtype) holding the transform
    j = pl.program_id(1)

    # The transform only depends on the row tile -> compute it once per row
    # tile (first vocab step), cast it to the decoder dtype once, and reuse it
    # across all vocab tiles.
    @pl.when(j == 0)
    def _():
        # Dense: x @ Wd^T + b  (MXU, f32 accumulate).
        h = jnp.dot(x_ref[...], w_ref[...], preferred_element_type=jnp.float32)
        h = h + b_ref[...].astype(jnp.float32)

        # gelu(x) = x * 0.5 * (1 + erf(x / sqrt(2)))
        h = h * 0.5 * (1.0 + jax.lax.erf(h * _INV_SQRT2))

        # Fused one-pass LayerNorm stats; clamp variance against cancellation.
        inv_h = 1.0 / h.shape[-1]
        mean = jnp.sum(h, axis=-1, keepdims=True) * inv_h
        mean_sq = jnp.sum(h * h, axis=-1, keepdims=True) * inv_h
        var = jnp.maximum(mean_sq - mean * mean, 0.0)
        hn = (h - mean) * jax.lax.rsqrt(var + _LN_EPS)

        t = (gamma_ref[...].astype(jnp.float32) * hn
             + beta_ref[...].astype(jnp.float32))
        t_ref[...] = t.astype(t_ref.dtype)   # cast ONCE per row tile

    # Decoder projection: transform @ E^T + decoder_bias (MXU, f32 accumulate).
    scores = jnp.dot(t_ref[...], dec_ref[...],
                     preferred_element_type=jnp.float32)
    scores = scores + dbias_ref[...].astype(jnp.float32)
    o_ref[...] = scores.astype(o_ref.dtype)


def _round_up(x, m):
    return ((x + m - 1) // m) * m


def _sublane_align(dtype):
    # Sublane packing: f32 -> 8 rows, bf16 -> 16, int8/fp8 -> 32.
    return 8 * max(1, 4 // jnp.dtype(dtype).itemsize)


def _vmem_estimate(tm, tn, H, x_dt, w_dt, dec_dt, out_dt, single_buffer_weights):
    isz = jnp.dtype(x_dt).itemsize
    wsz = jnp.dtype(w_dt).itemsize
    dsz = jnp.dtype(dec_dt).itemsize
    osz = jnp.dtype(out_dt).itemsize
    wbuf = 1 if single_buffer_weights else 2
    return (2 * tm * H * isz          # x row tile (double-buffered)
            + wbuf * H * H * wsz      # dense weight (grid-invariant)
            + wbuf * 3 * H * wsz      # dense bias / LN gamma / LN beta
            + 2 * H * tn * dsz        # decoder column tile (double-buffered)
            + 2 * tn * dsz            # decoder bias tile
            + 2 * tm * tn * osz       # output tile (double-buffered)
            + tm * H * dsz)           # transform scratch (decoder dtype)


@functools.partial(
    jax.jit,
    static_argnames=("tm", "tn", "out_dtype", "vmem_limit",
                     "single_buffer_weights"))
def _mlm_head_forward(x, w_t, b, gamma, beta, dec_t, dec_bias, *,
                      tm, tn, out_dtype, vmem_limit, single_buffer_weights):
    B, S, H = x.shape
    V = dec_t.shape[1]
    M = B * S

    x2 = x.reshape(M, H)
    b2 = b.reshape(1, H)
    g2 = gamma.reshape(1, H)
    be2 = beta.reshape(1, H)
    dbias2 = dec_bias.reshape(1, V)

    grid = (pl.cdiv(M, tm), pl.cdiv(V, tn))

    if single_buffer_weights:
        def inv_spec(shape):
            return pl.BlockSpec(shape, lambda i, j: (0, 0),
                                pipeline_mode=pl.Buffered(1))
    else:
        def inv_spec(shape):
            return pl.BlockSpec(shape, lambda i, j: (0, 0))

    out = pl.pallas_call(
        _mlm_head_kernel,
        out_shape=jax.ShapeDtypeStruct((M, V), out_dtype),
        grid_spec=pltpu.PrefetchScalarGridSpec(
            num_scalar_prefetch=0,
            grid=grid,
            in_specs=[
                pl.BlockSpec((tm, H), lambda i, j: (i, 0)),   # x row tile
                inv_spec((H, H)),                             # dense weight
                inv_spec((1, H)),                             # dense bias
                inv_spec((1, H)),                             # LN gamma
                inv_spec((1, H)),                             # LN beta
                pl.BlockSpec((H, tn), lambda i, j: (0, j)),   # decoder col tile
                pl.BlockSpec((1, tn), lambda i, j: (0, j)),   # decoder bias
            ],
            out_specs=pl.BlockSpec((tm, tn), lambda i, j: (i, j)),
            scratch_shapes=[pltpu.VMEM((tm, H), dec_t.dtype)],
        ),
        compiler_params=pltpu.CompilerParams(
            dimension_semantics=("parallel", "arbitrary"),
            vmem_limit_bytes=vmem_limit,
        ),
    )(x2, w_t, b2, g2, be2, dec_t, dbias2)

    return out.reshape(B, S, V)


# Candidate (tm, tn) plans, largest first: bigger tm cuts decoder-weight
# HBM re-streaming (once per row tile), bigger tn amortizes grid-step overhead.
_TILE_PLANS = ((1024, 2048), (1024, 1024), (512, 2048), (512, 1024),
               (512, 512), (256, 1024), (256, 512), (128, 512), (128, 256))


def bert_only_mlm_head(x, w_t, b, gamma, beta, dec_t, dec_bias, *,
                       out_dtype=None):
    """BertOnlyMLMHead forward.

    x: (B,S,H); w_t: (H,H)=dense.weight.T; b/gamma/beta: (H,);
    dec_t: (H,V)=embedding_weight.T (tied decoder); dec_bias: (V,).
    """
    B, S, H = x.shape
    V = dec_t.shape[1]
    M = B * S
    out_dtype = jnp.dtype(x.dtype if out_dtype is None else out_dtype)

    # Generation-aware VMEM budget (v7x: 64 MiB physical, v5e/v6e: 128 MiB).
    try:
        vmem_cap = int(pltpu.get_tpu_info().vmem_capacity_bytes)
    except Exception:
        vmem_cap = 64 << 20          # conservative fallback, fits every gen
    budget = vmem_cap - (16 << 20)

    align = _sublane_align(x.dtype)

    def clamp_plan(tm, tn):
        tm = min(tm, _round_up(M, align))
        # Keep >= 2 row tiles when possible so both v7x TCs get work on the
        # "parallel" row axis.
        if M > align and pl.cdiv(M, tm) < 2:
            tm = _round_up(pl.cdiv(M, 2), align)
        if V < 128:
            tn = V                          # block must equal full lane dim
        else:
            tn = min(tn, (V // 128) * 128)  # lane-dense; ragged tail is masked
        return tm, tn

    plan = None
    for tm_c, tn_c in _TILE_PLANS:
        tm_c, tn_c = clamp_plan(tm_c, tn_c)
        if _vmem_estimate(tm_c, tn_c, H, x.dtype, w_t.dtype, dec_t.dtype,
                          out_dtype, True) <= budget:
            plan = (tm_c, tn_c)
            break
    if plan is None:
        plan = clamp_plan(128, 256)
    tm, tn = plan

    est = _vmem_estimate(tm, tn, H, x.dtype, w_t.dtype, dec_t.dtype,
                         out_dtype, True)
    vmem_limit = int(min(vmem_cap, est + (16 << 20)))

    try:
        return _mlm_head_forward(
            x, w_t, b, gamma, beta, dec_t, dec_bias,
            tm=tm, tn=tn, out_dtype=out_dtype, vmem_limit=vmem_limit,
            single_buffer_weights=True)
    except Exception:
        # Fallback if this JAX build rejects pl.Buffered(1) single-buffering.
        return _mlm_head_forward(
            x, w_t, b, gamma, beta, dec_t, dec_bias,
            tm=tm, tn=tn, out_dtype=out_dtype, vmem_limit=vmem_limit,
            single_buffer_weights=False)


def _reference(x, w_t, b, gamma, beta, dec_t, dec_bias):
    """Pure-JAX mirror of the PyTorch module (erf gelu, eps=1e-12 LayerNorm)."""
    xf = x.astype(jnp.float32)
    h = jnp.einsum("bsh,hk->bsk", xf, w_t.astype(jnp.float32)) + b
    h = h * 0.5 * (1.0 + jax.lax.erf(h / jnp.sqrt(2.0)))
    u = jnp.mean(h, axis=-1, keepdims=True)
    s = jnp.mean((h - u) ** 2, axis=-1, keepdims=True)
    t = gamma * ((h - u) / jnp.sqrt(s + 1e-12)) + beta
    return jnp.einsum("bsh,hv->bsv", t, dec_t.astype(jnp.float32)) + dec_bias


if __name__ == "__main__":
    root = jax.random.PRNGKey(0)
    k_case1, k_case2 = jax.random.split(root, 2)

    def make_inputs(B, S, H, V, key):
        kx, kw, kb, kg, kbe, ke, kdb = jax.random.split(key, 7)
        x = jax.random.normal(kx, (B, S, H), dtype=jnp.float32)
        # nn.Linear(H,H): weight is (out,in); kernel takes its transpose.
        w = jax.random.normal(kw, (H, H), dtype=jnp.float32) * 0.02
        b = jax.random.normal(kb, (H,), dtype=jnp.float32) * 0.02
        gamma = 1.0 + 0.1 * jax.random.normal(kg, (H,), dtype=jnp.float32)
        beta = 0.1 * jax.random.normal(kbe, (H,), dtype=jnp.float32)
        # Tied embedding weight (vocab, hidden); decoder computes t @ E^T.
        emb = jax.random.normal(ke, (V, H), dtype=jnp.float32) * 0.02
        dec_bias = 0.01 * jax.random.normal(kdb, (V,), dtype=jnp.float32)
        return x, w.T, b, gamma, beta, emb.T, dec_bias

    # Small BERT-like config: batch=2, seq=8, hidden=32, vocab=64.
    args = make_inputs(2, 8, 32, 64, k_case1)
    out = jax.block_until_ready(bert_only_mlm_head(*args))
    ref = _reference(*args)
    assert out.shape == (2, 8, 64)
    assert jnp.allclose(out, ref, atol=1e-4, rtol=1e-4), "mismatch (aligned)"

    # Ragged case (rows and vocab not multiples of the tile sizes): exercises
    # the no-pad / no-post-slice path with masked boundary tiles.
    args2 = make_inputs(1, 10, 32, 200, k_case2)
    out2 = jax.block_until_ready(bert_only_mlm_head(*args2))
    ref2 = _reference(*args2)
    assert out2.shape == (1, 10, 200)
    assert jnp.allclose(out2, ref2, atol=1e-4, rtol=1e-4), "mismatch (ragged)"

    print("KERNEL_OK")
</pallas_src>

<mosaic_0001>
module attributes {stable_mosaic.version = 11 : i64} {
  func.func @_mlm_head_kernel(%arg0: i32, %arg1: i32, %arg2: memref<8x32xf32, #tpu.memory_space<vmem>>, %arg3: memref<32x32xf32, #tpu.memory_space<vmem>>, %arg4: memref<1x32xf32, #tpu.memory_space<vmem>>, %arg5: memref<1x32xf32, #tpu.memory_space<vmem>>, %arg6: memref<1x32xf32, #tpu.memory_space<vmem>>, %arg7: memref<32x64xf32, #tpu.memory_space<vmem>>, %arg8: memref<1x64xf32, #tpu.memory_space<vmem>>, %arg9: memref<8x64xf32, #tpu.memory_space<vmem>>, %arg10: memref<8x32xf32, #tpu.memory_space<vmem>>) attributes {dimension_semantics = [#tpu.dimension_semantics<parallel>, #tpu.dimension_semantics<arbitrary>], iteration_bounds = array<i64: 2, 1>, scalar_prefetch = 0 : i64, scratch_operands = 1 : i64, tpu.core_type = #tpu.core_type<tc>, window_params = [{transform_indices = @transform_0, window_bounds = array<i64: 8, 32>}, {pipeline_mode = #tpu.pipeline_mode<synchronous>, transform_indices = @transform_1, window_bounds = array<i64: 32, 32>}, {pipeline_mode = #tpu.pipeline_mode<synchronous>, transform_indices = @transform_2, window_bounds = array<i64: 1, 32>}, {pipeline_mode = #tpu.pipeline_mode<synchronous>, transform_indices = @transform_3, window_bounds = array<i64: 1, 32>}, {pipeline_mode = #tpu.pipeline_mode<synchronous>, transform_indices = @transform_4, window_bounds = array<i64: 1, 32>}, {transform_indices = @transform_5, window_bounds = array<i64: 32, 64>}, {transform_indices = @transform_6, window_bounds = array<i64: 1, 64>}, {transform_indices = @transform_7, window_bounds = array<i64: 8, 64>}]} {
    %c0_i32 = arith.constant 0 : i32
    %0 = arith.cmpi eq, %arg1, %c0_i32 : i32
    %1 = arith.extui %0 : i1 to i32
    %c0_i32_0 = arith.constant 0 : i32
    %2 = arith.cmpi ne, %1, %c0_i32_0 : i32
    scf.if %2 {
      %c0_8 = arith.constant 0 : index
      %c0_9 = arith.constant 0 : index
      %10 = vector.load %arg2[%c0_8, %c0_9] : memref<8x32xf32, #tpu.memory_space<vmem>>, vector<8x32xf32>
      %c0_10 = arith.constant 0 : index
      %c0_11 = arith.constant 0 : index
      %11 = vector.load %arg3[%c0_10, %c0_11] : memref<32x32xf32, #tpu.memory_space<vmem>>, vector<32x32xf32>
      %cst_12 = arith.constant dense<0.000000e+00> : vector<8x32xf32>
      %12 = tpu.matmul %10, %11, %cst_12 {dimension_numbers = #tpu.dot_dimension_numbers<[1], [0], [0], [1], [0, 0, 1, 1], [], []>} : vector<8x32xf32>, vector<32x32xf32>, vector<8x32xf32> -> vector<8x32xf32>
      %c0_13 = arith.constant 0 : index
      %c0_14 = arith.constant 0 : index
      %13 = vector.load %arg4[%c0_13, %c0_14] : memref<1x32xf32, #tpu.memory_space<vmem>>, vector<1x32xf32>
      %14 = vector.broadcast %13 : vector<1x32xf32> to vector<8x32xf32>
      %15 = arith.addf %12, %14 : vector<8x32xf32>
      %cst_15 = arith.constant 5.000000e-01 : f32
      %16 = vector.broadcast %cst_15 : f32 to vector<8x32xf32>
      %17 = arith.mulf %15, %16 : vector<8x32xf32>
      %cst_16 = arith.constant 0.707106769 : f32
      %18 = vector.broadcast %cst_16 : f32 to vector<8x32xf32>
      %19 = arith.mulf %15, %18 : vector<8x32xf32>
      %20 = math.erf %19 : vector<8x32xf32>
      %cst_17 = arith.constant 1.000000e+00 : f32
      %21 = vector.broadcast %cst_17 : f32 to vector<8x32xf32>
      %22 = arith.addf %21, %20 : vector<8x32xf32>
      %23 = arith.mulf %17, %22 : vector<8x32xf32>
      %cst_18 = arith.constant dense<0.000000e+00> : vector<8xf32>
      %24 = vector.multi_reduction <add>, %23, %cst_18 [1] : vector<8x32xf32> to vector<8xf32>
      %25 = vector.shape_cast %24 : vector<8xf32> to vector<8x1xf32>
      %cst_19 = arith.constant 3.125000e-02 : f32
      %26 = vector.broadcast %cst_19 : f32 to vector<8x1xf32>
      %27 = arith.mulf %25, %26 : vector<8x1xf32>
      %28 = arith.mulf %23, %23 : vector<8x32xf32>
      %cst_20 = arith.constant dense<0.000000e+00> : vector<8xf32>
      %29 = vector.multi_reduction <add>, %28, %cst_20 [1] : vector<8x32xf32> to vector<8xf32>
      %30 = vector.shape_cast %29 : vector<8xf32> to vector<8x1xf32>
      %cst_21 = arith.constant 3.125000e-02 : f32
      %31 = vector.broadcast %cst_21 : f32 to vector<8x1xf32>
      %32 = arith.mulf %30, %31 : vector<8x1xf32>
      %33 = arith.mulf %27, %27 : vector<8x1xf32>
      %34 = arith.subf %32, %33 : vector<8x1xf32>
      %cst_22 = arith.constant 0.000000e+00 : f32
      %35 = vector.broadcast %cst_22 : f32 to vector<8x1xf32>
      %36 = arith.maximumf %34, %35 : vector<8x1xf32>
      %37 = vector.broadcast %27 : vector<8x1xf32> to vector<8x32xf32>
      %38 = arith.subf %23, %37 : vector<8x32xf32>
      %cst_23 = arith.constant 9.99999996E-13 : f32
      %39 = vector.broadcast %cst_23 : f32 to vector<8x1xf32>
      %40 = arith.addf %36, %39 : vector<8x1xf32>
      %41 = math.rsqrt %40 : vector<8x1xf32>
      %42 = vector.broadcast %41 : vector<8x1xf32> to vector<8x32xf32>
      %43 = arith.mulf %38, %42 : vector<8x32xf32>
      %c0_24 = arith.constant 0 : index
      %c0_25 = arith.constant 0 : index
      %44 = vector.load %arg5[%c0_24, %c0_25] : memref<1x32xf32, #tpu.memory_space<vmem>>, vector<1x32xf32>
      %45 = vector.broadcast %44 : vector<1x32xf32> to vector<8x32xf32>
      %46 = arith.mulf %45, %43 : vector<8x32xf32>
      %c0_26 = arith.constant 0 : index
      %c0_27 = arith.constant 0 : index
      %47 = vector.load %arg6[%c0_26, %c0_27] : memref<1x32xf32, #tpu.memory_space<vmem>>, vector<1x32xf32>
      %48 = vector.broadcast %47 : vector<1x32xf32> to vector<8x32xf32>
      %49 = arith.addf %46, %48 : vector<8x32xf32>
      %c0_28 = arith.constant 0 : index
      %c0_29 = arith.constant 0 : index
      %50 = vector.load %arg10[%c0_28, %c0_29] : memref<8x32xf32, #tpu.memory_space<vmem>>, vector<8x32xf32>
      tpu.vector_store %arg10[%c0_28, %c0_29], %49 {strides = array<i32>} : memref<8x32xf32, #tpu.memory_space<vmem>>, vector<8x32xf32>,
    } else {
    }
    %c0 = arith.constant 0 : index
    %c0_1 = arith.constant 0 : index
    %3 = vector.load %arg10[%c0, %c0_1] : memref<8x32xf32, #tpu.memory_space<vmem>>, vector<8x32xf32>
    %c0_2 = arith.constant 0 : index
    %c0_3 = arith.constant 0 : index
    %4 = vector.load %arg7[%c0_2, %c0_3] : memref<32x64xf32, #tpu.memory_space<vmem>>, vector<32x64xf32>
    %cst = arith.constant dense<0.000000e+00> : vector<8x64xf32>
    %5 = tpu.matmul %3, %4, %cst {dimension_numbers = #tpu.dot_dimension_numbers<[1], [0], [0], [1], [0, 0, 1, 1], [], []>} : vector<8x32xf32>, vector<32x64xf32>, vector<8x64xf32> -> vector<8x64xf32>
    %c0_4 = arith.constant 0 : index
    %c0_5 = arith.constant 0 : index
    %6 = vector.load %arg8[%c0_4, %c0_5] : memref<1x64xf32, #tpu.memory_space<vmem>>, vector<1x64xf32>
    %7 = vector.broadcast %6 : vector<1x64xf32> to vector<8x64xf32>
    %8 = arith.addf %5, %7 : vector<8x64xf32>
    %c0_6 = arith.constant 0 : index
    %c0_7 = arith.constant 0 : index
    %9 = vector.load %arg9[%c0_6, %c0_7] : memref<8x64xf32, #tpu.memory_space<vmem>>, vector<8x64xf32>
    tpu.vector_store %arg9[%c0_6, %c0_7], %8 {strides = array<i32>} : memref<8x64xf32, #tpu.memory_space<vmem>>, vector<8x64xf32>,
    return
  }
  func.func @transform_0(%arg0: i32, %arg1: i32) -> (i32, i32) {
    %c0_i32 = arith.constant 0 : i32
    %c0_i32_0 = arith.constant 0 : i32
    return %arg0, %c0_i32 : i32, i32
  }
  func.func @transform_1(%arg0: i32, %arg1: i32) -> (i32, i32) {
    %c0_i32 = arith.constant 0 : i32
    %c0_i32_0 = arith.constant 0 : i32
    %c0_i32_1 = arith.constant 0 : i32
    return %c0_i32, %c0_i32_0 : i32, i32
  }
  func.func @transform_2(%arg0: i32, %arg1: i32) -> (i32, i32) {
    %c0_i32 = arith.constant 0 : i32
    %c0_i32_0 = arith.constant 0 : i32
    %c0_i32_1 = arith.constant 0 : i32
    return %c0_i32, %c0_i32_0 : i32, i32
  }
  func.func @transform_3(%arg0: i32, %arg1: i32) -> (i32, i32) {
    %c0_i32 = arith.constant 0 : i32
    %c0_i32_0 = arith.constant 0 : i32
    %c0_i32_1 = arith.constant 0 : i32
    return %c0_i32, %c0_i32_0 : i32, i32
  }
  func.func @transform_4(%arg0: i32, %arg1: i32) -> (i32, i32) {
    %c0_i32 = arith.constant 0 : i32
    %c0_i32_0 = arith.constant 0 : i32
    %c0_i32_1 = arith.constant 0 : i32
    return %c0_i32, %c0_i32_0 : i32, i32
  }
  func.func @transform_5(%arg0: i32, %arg1: i32) -> (i32, i32) {
    %c0_i32 = arith.constant 0 : i32
    %c0_i32_0 = arith.constant 0 : i32
    return %c0_i32, %arg1 : i32, i32
  }
  func.func @transform_6(%arg0: i32, %arg1: i32) -> (i32, i32) {
    %c0_i32 = arith.constant 0 : i32
    %c0_i32_0 = arith.constant 0 : i32
    return %c0_i32, %arg1 : i32, i32
  }
  func.func @transform_7(%arg0: i32, %arg1: i32) -> (i32, i32) {
    %c0_i32 = arith.constant 0 : i32
    return %arg0, %arg1 : i32, i32
  }
}

module attributes {stable_mosaic.version = 11 : i64} {
  func.func @_mlm_head_kernel(%arg0: i32, %arg1: i32, %arg2: memref<8x32xf32, #tpu.memory_space<vmem>>, %arg3: memref<32x32xf32, #tpu.memory_space<vmem>>, %arg4: memref<1x32xf32, #tpu.memory_space<vmem>>, %arg5: memref<1x32xf32, #tpu.memory_space<vmem>>, %arg6: memref<1x32xf32, #tpu.memory_space<vmem>>, %arg7: memref<32x64xf32, #tpu.memory_space<vmem>>, %arg8: memref<1x64xf32, #tpu.memory_space<vmem>>, %arg9: memref<8x64xf32, #tpu.memory_space<vmem>>, %arg10: memref<8x32xf32, #tpu.memory_space<vmem>>) attributes {dimension_semantics = [#tpu.dimension_semantics<parallel>, #tpu.dimension_semantics<arbitrary>], iteration_bounds = array<i64: 2, 1>, scalar_prefetch = 0 : i64, scratch_operands = 1 : i64, tpu.core_type = #tpu.core_type<tc>, window_params = [{transform_indices = @transform_0, window_bounds = array<i64: 8, 32>}, {pipeline_mode = #tpu.pipeline_mode<synchronous>, transform_indices = @transform_1, window_bounds = array<i64: 32, 32>}, {pipeline_mode = #tpu.pipeline_mode<synchronous>, transform_indices = @transform_2, window_bounds = array<i64: 1, 32>}, {pipeline_mode = #tpu.pipeline_mode<synchronous>, transform_indices = @transform_3, window_bounds = array<i64: 1, 32>}, {pipeline_mode = #tpu.pipeline_mode<synchronous>, transform_indices = @transform_4, window_bounds = array<i64: 1, 32>}, {transform_indices = @transform_5, window_bounds = array<i64: 32, 64>}, {transform_indices = @transform_6, window_bounds = array<i64: 1, 64>}, {transform_indices = @transform_7, window_bounds = array<i64: 8, 64>}]} {
    %c0_i32 = arith.constant 0 : i32
    %0 = arith.cmpi eq, %arg1, %c0_i32 : i32
    %1 = arith.extui %0 : i1 to i32
    %c0_i32_0 = arith.constant 0 : i32
    %2 = arith.cmpi ne, %1, %c0_i32_0 : i32
    scf.if %2 {
      %c0_8 = arith.constant 0 : index
      %c0_9 = arith.constant 0 : index
      %10 = vector.load %arg2[%c0_8, %c0_9] : memref<8x32xf32, #tpu.memory_space<vmem>>, vector<8x32xf32>
      %c0_10 = arith.constant 0 : index
      %c0_11 = arith.constant 0 : index
      %11 = vector.load %arg3[%c0_10, %c0_11] : memref<32x32xf32, #tpu.memory_space<vmem>>, vector<32x32xf32>
      %cst_12 = arith.constant dense<0.000000e+00> : vector<8x32xf32>
      %12 = tpu.matmul %10, %11, %cst_12 {dimension_numbers = #tpu.dot_dimension_numbers<[1], [0], [0], [1], [0, 0, 1, 1], [], []>} : vector<8x32xf32>, vector<32x32xf32>, vector<8x32xf32> -> vector<8x32xf32>
      %c0_13 = arith.constant 0 : index
      %c0_14 = arith.constant 0 : index
      %13 = vector.load %arg4[%c0_13, %c0_14] : memref<1x32xf32, #tpu.memory_space<vmem>>, vector<1x32xf32>
      %14 = vector.broadcast %13 : vector<1x32xf32> to vector<8x32xf32>
      %15 = arith.addf %12, %14 : vector<8x32xf32>
      %cst_15 = arith.constant 5.000000e-01 : f32
      %16 = vector.broadcast %cst_15 : f32 to vector<8x32xf32>
      %17 = arith.mulf %15, %16 : vector<8x32xf32>
      %cst_16 = arith.constant 0.707106769 : f32
      %18 = vector.broadcast %cst_16 : f32 to vector<8x32xf32>
      %19 = arith.mulf %15, %18 : vector<8x32xf32>
      %20 = math.erf %19 : vector<8x32xf32>
      %cst_17 = arith.constant 1.000000e+00 : f32
      %21 = vector.broadcast %cst_17 : f32 to vector<8x32xf32>
      %22 = arith.addf %21, %20 : vector<8x32xf32>
      %23 = arith.mulf %17, %22 : vector<8x32xf32>
      %cst_18 = arith.constant dense<0.000000e+00> : vector<8xf32>
      %24 = vector.multi_reduction <add>, %23, %cst_18 [1] : vector<8x32xf32> to vector<8xf32>
      %25 = vector.shape_cast %24 : vector<8xf32> to vector<8x1xf32>
      %cst_19 = arith.constant 3.125000e-02 : f32
      %26 = vector.broadcast %cst_19 : f32 to vector<8x1xf32>
      %27 = arith.mulf %25, %26 : vector<8x1xf32>
      %28 = arith.mulf %23, %23 : vector<8x32xf32>
      %cst_20 = arith.constant dense<0.000000e+00> : vector<8xf32>
      %29 = vector.multi_reduction <add>, %28, %cst_20 [1] : vector<8x32xf32> to vector<8xf32>
      %30 = vector.shape_cast %29 : vector<8xf32> to vector<8x1xf32>
      %cst_21 = arith.constant 3.125000e-02 : f32
      %31 = vector.broadcast %cst_21 : f32 to vector<8x1xf32>
      %32 = arith.mulf %30, %31 : vector<8x1xf32>
      %33 = arith.mulf %27, %27 : vector<8x1xf32>
      %34 = arith.subf %32, %33 : vector<8x1xf32>
      %cst_22 = arith.constant 0.000000e+00 : f32
      %35 = vector.broadcast %cst_22 : f32 to vector<8x1xf32>
      %36 = arith.maximumf %34, %35 : vector<8x1xf32>
      %37 = vector.broadcast %27 : vector<8x1xf32> to vector<8x32xf32>
      %38 = arith.subf %23, %37 : vector<8x32xf32>
      %cst_23 = arith.constant 9.99999996E-13 : f32
      %39 = vector.broadcast %cst_23 : f32 to vector<8x1xf32>
      %40 = arith.addf %36, %39 : vector<8x1xf32>
      %41 = math.rsqrt %40 : vector<8x1xf32>
      %42 = vector.broadcast %41 : vector<8x1xf32> to vector<8x32xf32>
      %43 = arith.mulf %38, %42 : vector<8x32xf32>
      %c0_24 = arith.constant 0 : index
      %c0_25 = arith.constant 0 : index
      %44 = vector.load %arg5[%c0_24, %c0_25] : memref<1x32xf32, #tpu.memory_space<vmem>>, vector<1x32xf32>
      %45 = vector.broadcast %44 : vector<1x32xf32> to vector<8x32xf32>
      %46 = arith.mulf %45, %43 : vector<8x32xf32>
      %c0_26 = arith.constant 0 : index
      %c0_27 = arith.constant 0 : index
      %47 = vector.load %arg6[%c0_26, %c0_27] : memref<1x32xf32, #tpu.memory_space<vmem>>, vector<1x32xf32>
      %48 = vector.broadcast %47 : vector<1x32xf32> to vector<8x32xf32>
      %49 = arith.addf %46, %48 : vector<8x32xf32>
      %c0_28 = arith.constant 0 : index
      %c0_29 = arith.constant 0 : index
      %50 = vector.load %arg10[%c0_28, %c0_29] : memref<8x32xf32, #tpu.memory_space<vmem>>, vector<8x32xf32>
      tpu.vector_store %arg10[%c0_28, %c0_29], %49 {strides = array<i32>} : memref<8x32xf32, #tpu.memory_space<vmem>>, vector<8x32xf32>,
    } else {
    }
    %c0 = arith.constant 0 : index
    %c0_1 = arith.constant 0 : index
    %3 = vector.load %arg10[%c0, %c0_1] : memref<8x32xf32, #tpu.memory_space<vmem>>, vector<8x32xf32>
    %c0_2 = arith.constant 0 : index
    %c0_3 = arith.constant 0 : index
    %4 = vector.load %arg7[%c0_2, %c0_3] : memref<32x64xf32, #tpu.memory_space<vmem>>, vector<32x64xf32>
    %cst = arith.constant dense<0.000000e+00> : vector<8x64xf32>
    %5 = tpu.matmul %3, %4, %cst {dimension_numbers = #tpu.dot_dimension_numbers<[1], [0], [0], [1], [0, 0, 1, 1], [], []>} : vector<8x32xf32>, vector<32x64xf32>, vector<8x64xf32> -> vector<8x64xf32>
    %c0_4 = arith.constant 0 : index
    %c0_5 = arith.constant 0 : index
    %6 = vector.load %arg8[%c0_4, %c0_5] : memref<1x64xf32, #tpu.memory_space<vmem>>, vector<1x64xf32>
    %7 = vector.broadcast %6 : vector<1x64xf32> to vector<8x64xf32>
    %8 = arith.addf %5, %7 : vector<8x64xf32>
    %c0_6 = arith.constant 0 : index
    %c0_7 = arith.constant 0 : index
    %9 = vector.load %arg9[%c0_6, %c0_7] : memref<8x64xf32, #tpu.memory_space<vmem>>, vector<8x64xf32>
    tpu.vector_store %arg9[%c0_6, %c0_7], %8 {strides = array<i32>} : memref<8x64xf32, #tpu.memory_space<vmem>>, vector<8x64xf32>,
    return
  }
  func.func @transform_0(%arg0: i32, %arg1: i32) -> (i32, i32) {
    %c0_i32 = arith.constant 0 : i32
    %c0_i32_0 = arith.constant 0 : i32
    return %arg0, %c0_i32 : i32, i32
  }
  func.func @transform_1(%arg0: i32, %arg1: i32) -> (i32, i32) {
    %c0_i32 = arith.constant 0 : i32
    %c0_i32_0 = arith.constant 0 : i32
    %c0_i32_1 = arith.constant 0 : i32
    return %c0_i32, %c0_i32_0 : i32, i32
  }
  func.func @transform_2(%arg0: i32, %arg1: i32) -> (i32, i32) {
    %c0_i32 = arith.constant 0 : i32
    %c0_i32_0 = arith.constant 0 : i32
    %c0_i32_1 = arith.constant 0 : i32
    return %c0_i32, %c0_i32_0 : i32, i32
  }
  func.func @transform_3(%arg0: i32, %arg1: i32) -> (i32, i32) {
    %c0_i32 = arith.constant 0 : i32
    %c0_i32_0 = arith.constant 0 : i32
    %c0_i32_1 = arith.constant 0 : i32
    return %c0_i32, %c0_i32_0 : i32, i32
  }
  func.func @transform_4(%arg0: i32, %arg1: i32) -> (i32, i32) {
    %c0_i32 = arith.constant 0 : i32
    %c0_i32_0 = arith.constant 0 : i32
    %c0_i32_1 = arith.constant 0 : i32
    return %c0_i32, %c0_i32_0 : i32, i32
  }
  func.func @transform_5(%arg0: i32, %arg1: i32) -> (i32, i32) {
    %c0_i32 = arith.constant 0 : i32
    %c0_i32_0 = arith.constant 0 : i32
    return %c0_i32, %arg1 : i32, i32
  }
  func.func @transform_6(%arg0: i32, %arg1: i32) -> (i32, i32) {
    %c0_i32 = arith.constant 0 : i32
    %c0_i32_0 = arith.constant 0 : i32
    return %c0_i32, %arg1 : i32, i32
  }
  func.func @transform_7(%arg0: i32, %arg1: i32) -> (i32, i32) {
    %c0_i32 = arith.constant 0 : i32
    return %arg0, %arg1 : i32, i32
  }
}

</mosaic_0001>

<llo_original>
// kernel: _mlm_head_forward.1
$region0: #{_mlm_head_forward.1}
  #allocation0 [shape = 'u32[]', space=smem, size = 0x4, offset = 0x4, fixed_abs, tag = 'smem constant byte address 0x4 - core index']
  #allocation1 [shape = 'u32[144,128]{1,0:T(1,128)}', space=vmem, size = 0x12000, scoped, tag = 'internal scratch']
  #allocation2 [shape = 'f32[8,32]{1,0:T(8,128)}', space=vmem, size = 0x1000, scoped, tag = 'scratch operand']
  %s0 = inlined_call_operand.hbm [shape: f32[16,32], index: 0, kind: input, shape index: {}]
  %s1 = inlined_call_operand.hbm [shape: f32[32,32], index: 1, kind: input, shape index: {}]
  %s2 = inlined_call_operand.vmem [shape: f32[1,32], index: 2, kind: input, shape index: {}]
  %s3 = inlined_call_operand.vmem [shape: f32[1,32], index: 3, kind: input, shape index: {}]
  %s4 = inlined_call_operand.vmem [shape: f32[1,32], index: 4, kind: input, shape index: {}]
  %s5 = inlined_call_operand.vmem [shape: f32[32,64], index: 5, kind: input, shape index: {}]
  %s6 = inlined_call_operand.vmem [shape: f32[1,64], index: 6, kind: input, shape index: {}]
  %s7 = inlined_call_operand.hbm [shape: f32[16,64], index: 7, kind: output, shape index: {}]
  %s8 = sld [smem:[#allocation0]]
  $region73: #{_mlm_head_forward.1} parent=0
    _
  %s10 = ssub.s32 1, %s8
  %s11 = scalar_select 0, %s10, %s8
  $region1: #{_mlm_head_forward.1} parent=0
    #allocation3 [shape = 'u8[8192]{0}', space=vmem, size = 0x2000, scoped, tag = 'input window, operand 0']
    #allocation4 [shape = 's32[2]{0}', space=sflag, size = 0x8, scoped, tag = 'scoped memory for _mlm_head_forward.1']
    #allocation5 [shape = 's32[2]{0}', space=sflag, size = 0x8, scoped, tag = 'scoped memory for _mlm_head_forward.1']
    #allocation6 [shape = 'u8[16384]{0}', space=vmem, size = 0x4000, scoped, tag = 'input window, operand 1, single buffered']
    #allocation7 [shape = 's32[1]{0}', space=sflag, size = 0x4, scoped, tag = 'scoped memory for _mlm_head_forward.1']
    #allocation8 [shape = 'u8[8192]{0}', space=vmem, size = 0x2000, scoped, tag = 'output window, operand 0']
    %12 = vsyncpa [#allocation4], 0
    %s13 = scalar_lea.sflag [#allocation4], 1
    %14 = vsyncpa %s13, 0
    %15 = vsyncpa [#allocation7], 0
    %16 = vsyncpa [#allocation5], 0
    %s17 = scalar_lea.sflag [#allocation5], 1
    %18 = vsyncpa %s17, 0
    loop: start=0, step=1, limit=4
    $region2: #{_mlm_head_forward.1} parent=1 // loop_pre_header
      _
    $region3: #{_mlm_head_forward.1} parent=1 // loop_header
      %s20 = sphi 0, %s24
      %p21 = scmp.ge.s32.totalorder %s20, 4
      %s27 = sphi 0, %s39
      %s28 = sphi 0, %s35
      %s29 = sphi 0, %s27
      %s30 = sphi 0, %s28
      %s31 = sphi 0, %s29
      %s32 = sphi 0, %s30
      %s42 = sphi 0, %s44
      %s45 = sphi 0, %s42
      %s46 = sphi 0, %s45
      %s62 = sphi 0, %s46
      %s66 = sphi 0, %s66
      %s68 = sphi 0, %s66
      %s69 = sphi 0, %s68
      %s83 = sphi 0, %s69
      %s87 = sphi 0, %s87
      %s89 = sphi 0, %s87
      %s90 = sphi 0, %s89
      %s104 = sphi 0, %s90
      %s108 = sphi 0, %s108
      %s110 = sphi 0, %s108
      %s111 = sphi 0, %s110
      %s125 = sphi 0, %s111
      %s129 = sphi 0, %s129
      %s131 = sphi 0, %s129
      %s132 = sphi 0, %s131
      %s146 = sphi 0, %s132
      %s152 = sphi 0, %s154
      %s155 = sphi 0, %s152
      %s156 = sphi 0, %s155
      %s172 = sphi 0, %s156
      %s178 = sphi 0, %s180
      %s181 = sphi 0, %s178
      %s182 = sphi 0, %s181
      %s198 = sphi 0, %s182
      %s206 = sphi 0, %s208
      %s209 = sphi 0, %s206
      %s210 = sphi 0, %s209
      %s226 = sphi 0, %s210
    $region4: #{_mlm_head_forward.1} parent=1 // loop_header_branch
      %23 = sbr.rel (%p21) target = $region8
    $region5: #{_mlm_head_forward.1} parent=1 // loop_body
      %s25 = ssub.s32 %s20, 1
      %s26 = ssub.s32 %s20, 2
      %s33 = sadd.s32 1, %s28
      %p34 = scmp.ge.s32.totalorder %s33, 1
      %s35 = scalar_select %p34, 0, %s33
      %s36 = sadd.s32 1, %s27
      %s37 = scalar_select %p34, %s36, %s27
      %p38 = scmp.ge.s32.totalorder %s37, 2
      %s39 = scalar_select %p38, 0, %s37
      %s40 = ssub.s32 %s27, %s39
      %p41 = scmp.eq.s32.totalorder %s40, 0
      %s43 = sadd.s32 %s42, 1
      %s44 = scalar_select %p41, %s42, %s43
      %p47 = pneg %p41
      %p48 = scmp.eq.s32.totalorder %s20, 1
      %p49 = por %p47, %p48
      %p50 = scmp.ne.s32.totalorder %s42, %s45
      %p51 = scmp.eq.s32.totalorder %s20, 0
      %p52 = por %p50, %p51
      %p53 = scmp.ne.s32.totalorder %s42, %s45
      %p54 = scmp.eq.s32.totalorder %s25, 1
      %p55 = por %p53, %p54
      %p56 = scmp.ne.s32.totalorder %s45, %s46
      %p57 = scmp.eq.s32.totalorder %s25, 0
      %p58 = por %p56, %p57
      %p59 = scmp.ne.s32.totalorder %s45, %s46
      %p60 = scmp.eq.s32.totalorder %s26, 1
      %p61 = por %p59, %p60
      %p63 = scmp.ne.s32.totalorder %s46, %s62
      %p64 = scmp.eq.s32.totalorder %s26, 0
      %p65 = por %p63, %p64
      %s67 = sadd.s32 %s66, 1
      %p70 = scmp.eq.s32.totalorder %s20, 1
      %p71 = scmp.ne.s32.totalorder %s66, %s68
      %p72 = scmp.eq.s32.totalorder %s20, 0
      %p73 = por %p71, %p72
      %p74 = scmp.ne.s32.totalorder %s66, %s68
      %p75 = scmp.eq.s32.totalorder %s25, 1
      %p76 = por %p74, %p75
      %p77 = scmp.ne.s32.totalorder %s68, %s69
      %p78 = scmp.eq.s32.totalorder %s25, 0
      %p79 = por %p77, %p78
      %p80 = scmp.ne.s32.totalorder %s68, %s69
      %p81 = scmp.eq.s32.totalorder %s26, 1
      %p82 = por %p80, %p81
      %p84 = scmp.ne.s32.totalorder %s69, %s83
      %p85 = scmp.eq.s32.totalorder %s26, 0
      %p86 = por %p84, %p85
      %s88 = sadd.s32 %s87, 1
      %p91 = scmp.eq.s32.totalorder %s20, 1
      %p92 = scmp.ne.s32.totalorder %s87, %s89
      %p93 = scmp.eq.s32.totalorder %s20, 0
      %p94 = por %p92, %p93
      %p95 = scmp.ne.s32.totalorder %s87, %s89
      %p96 = scmp.eq.s32.totalorder %s25, 1
      %p97 = por %p95, %p96
      %p98 = scmp.ne.s32.totalorder %s89, %s90
      %p99 = scmp.eq.s32.totalorder %s25, 0
      %p100 = por %p98, %p99
      %p101 = scmp.ne.s32.totalorder %s89, %s90
      %p102 = scmp.eq.s32.totalorder %s26, 1
      %p103 = por %p101, %p102
      %p105 = scmp.ne.s32.totalorder %s90, %s104
      %p106 = scmp.eq.s32.totalorder %s26, 0
      %p107 = por %p105, %p106
      %s109 = sadd.s32 %s108, 1
      %p112 = scmp.eq.s32.totalorder %s20, 1
      %p113 = scmp.ne.s32.totalorder %s108, %s110
      %p114 = scmp.eq.s32.totalorder %s20, 0
      %p115 = por %p113, %p114
      %p116 = scmp.ne.s32.totalorder %s108, %s110
      %p117 = scmp.eq.s32.totalorder %s25, 1
      %p118 = por %p116, %p117
      %p119 = scmp.ne.s32.totalorder %s110, %s111
      %p120 = scmp.eq.s32.totalorder %s25, 0
      %p121 = por %p119, %p120
      %p122 = scmp.ne.s32.totalorder %s110, %s111
      %p123 = scmp.eq.s32.totalorder %s26, 1
      %p124 = por %p122, %p123
      %p126 = scmp.ne.s32.totalorder %s111, %s125
      %p127 = scmp.eq.s32.totalorder %s26, 0
      %p128 = por %p126, %p127
      %s130 = sadd.s32 %s129, 1
      %p133 = scmp.eq.s32.totalorder %s20, 1
      %p134 = scmp.ne.s32.totalorder %s129, %s131
      %p135 = scmp.eq.s32.totalorder %s20, 0
      %p136 = por %p134, %p135
      %p137 = scmp.ne.s32.totalorder %s129, %s131
      %p138 = scmp.eq.s32.totalorder %s25, 1
      %p139 = por %p137, %p138
      %p140 = scmp.ne.s32.totalorder %s131, %s132
      %p141 = scmp.eq.s32.totalorder %s25, 0
      %p142 = por %p140, %p141
      %p143 = scmp.ne.s32.totalorder %s131, %s132
      %p144 = scmp.eq.s32.totalorder %s26, 1
      %p145 = por %p143, %p144
      %p147 = scmp.ne.s32.totalorder %s132, %s146
      %p148 = scmp.eq.s32.totalorder %s26, 0
      %p149 = por %p147, %p148
      %s150 = ssub.s32 %s28, %s35
      %p151 = scmp.eq.s32.totalorder %s150, 0
      %s153 = sadd.s32 %s152, 1
      %s154 = scalar_select %p151, %s152, %s153
      %p157 = pneg %p151
      %p158 = scmp.eq.s32.totalorder %s20, 1
      %p159 = por %p157, %p158
      %p160 = scmp.ne.s32.totalorder %s152, %s155
      %p161 = scmp.eq.s32.totalorder %s20, 0
      %p162 = por %p160, %p161
      %p163 = scmp.ne.s32.totalorder %s152, %s155
      %p164 = scmp.eq.s32.totalorder %s25, 1
      %p165 = por %p163, %p164
      %p166 = scmp.ne.s32.totalorder %s155, %s156
      %p167 = scmp.eq.s32.totalorder %s25, 0
      %p168 = por %p166, %p167
      %p169 = scmp.ne.s32.totalorder %s155, %s156
      %p170 = scmp.eq.s32.totalorder %s26, 1
      %p171 = por %p169, %p170
      %p173 = scmp.ne.s32.totalorder %s156, %s172
      %p174 = scmp.eq.s32.totalorder %s26, 0
      %p175 = por %p173, %p174
      %s176 = ssub.s32 %s28, %s35
      %p177 = scmp.eq.s32.totalorder %s176, 0
      %s179 = sadd.s32 %s178, 1
      %s180 = scalar_select %p177, %s178, %s179
      %p183 = pneg %p177
      %p184 = scmp.eq.s32.totalorder %s20, 1
      %p185 = por %p183, %p184
      %p186 = scmp.ne.s32.totalorder %s178, %s181
      %p187 = scmp.eq.s32.totalorder %s20, 0
      %p188 = por %p186, %p187
      %p189 = scmp.ne.s32.totalorder %s178, %s181
      %p190 = scmp.eq.s32.totalorder %s25, 1
      %p191 = por %p189, %p190
      %p192 = scmp.ne.s32.totalorder %s181, %s182
      %p193 = scmp.eq.s32.totalorder %s25, 0
      %p194 = por %p192, %p193
      %p195 = scmp.ne.s32.totalorder %s181, %s182
      %p196 = scmp.eq.s32.totalorder %s26, 1
      %p197 = por %p195, %p196
      %p199 = scmp.ne.s32.totalorder %s182, %s198
      %p200 = scmp.eq.s32.totalorder %s26, 0
      %p201 = por %p199, %p200
      %s202 = ssub.s32 %s27, %s39
      %s203 = ssub.s32 %s28, %s35
      %s204 = sor.u32 %s202, %s203
      %p205 = scmp.eq.s32.totalorder %s204, 0
      %s207 = sadd.s32 %s206, 1
      %s208 = scalar_select %p205, %s206, %s207
      %p211 = pneg %p205
      %p212 = scmp.eq.s32.totalorder %s20, 1
      %p213 = por %p211, %p212
      %p214 = scmp.ne.s32.totalorder %s206, %s209
      %p215 = scmp.eq.s32.totalorder %s20, 0
      %p216 = por %p214, %p215
      %p217 = scmp.ne.s32.totalorder %s206, %s209
      %p218 = scmp.eq.s32.totalorder %s25, 1
      %p219 = por %p217, %p218
      %p220 = scmp.ne.s32.totalorder %s209, %s210
      %p221 = scmp.eq.s32.totalorder %s25, 0
      %p222 = por %p220, %p221
      %p223 = scmp.ne.s32.totalorder %s209, %s210
      %p224 = scmp.eq.s32.totalorder %s26, 1
      %p225 = por %p223, %p224
      %p227 = scmp.ne.s32.totalorder %s210, %s226
      %p228 = scmp.eq.s32.totalorder %s26, 0
      %p229 = por %p227, %p228
      %p230 = scmp.le.s32.totalorder 1, %s20
      %p231 = scmp.lt.s32.totalorder %s20, 3
      %p232 = pnand %p230, %p231
      %p233 = pneg %p232
      // Predicated region
      $region9: #{_mlm_head_forward.1} parent=5 // pred_check
        _
      $region10: #{_mlm_head_forward.1} parent=5 // pred_check_branch
        %235 = sbr.rel (%p232) target = $region12
      $region11: #{_mlm_head_forward.1} parent=5 // pred_region
        %s236 = ssub.s32 %s20, 1
        // Predicated region
        $region13: #{_mlm_head_forward.1} parent=11 // pred_check
          %p237 = pneg %p79
        $region14: #{_mlm_head_forward.1} parent=11 // pred_check_branch
          %239 = sbr.rel (%p237) target = $region16
        $region15: #{_mlm_head_forward.1} parent=11 // pred_region
          %s241 = ssub.s32 512, 512
          %242 = vsyncadd [#allocation7], %s241
          %s243 = sshll.u32 [#allocation6], 4
          %s244 = int_to_ptr.vmem [resolvable:$true] %s243
          %249 = dma.hbm_to_vmem [thread:$0]  %s1, 512, %s244, [#allocation7], 128, 128, 8
        $region16: #{_mlm_head_forward.1} parent=11 // pred_fallthru
          _
        // Predicated region
        $region17: #{_mlm_head_forward.1} parent=11 // pred_check
          %p250 = pneg %p100
        $region18: #{_mlm_head_forward.1} parent=11 // pred_check_branch
          %252 = sbr.rel (%p250) target = $region20
        $region19: #{_mlm_head_forward.1} parent=11 // pred_region
          _
        $region20: #{_mlm_head_forward.1} parent=11 // pred_fallthru
          _
        // Predicated region
        $region21: #{_mlm_head_forward.1} parent=11 // pred_check
          %p253 = pneg %p121
        $region22: #{_mlm_head_forward.1} parent=11 // pred_check_branch
          %255 = sbr.rel (%p253) target = $region24
        $region23: #{_mlm_head_forward.1} parent=11 // pred_region
          _
        $region24: #{_mlm_head_forward.1} parent=11 // pred_fallthru
          _
        // Predicated region
        $region25: #{_mlm_head_forward.1} parent=11 // pred_check
          %p256 = pneg %p142
        $region26: #{_mlm_head_forward.1} parent=11 // pred_check_branch
          %258 = sbr.rel (%p256) target = $region28
        $region27: #{_mlm_head_forward.1} parent=11 // pred_region
          _
        $region28: #{_mlm_head_forward.1} parent=11 // pred_fallthru
          _
        // Predicated region
        $region29: #{_mlm_head_forward.1} parent=11 // pred_check
          %p259 = pneg %p168
        $region30: #{_mlm_head_forward.1} parent=11 // pred_check_branch
          %261 = sbr.rel (%p259) target = $region32
        $region31: #{_mlm_head_forward.1} parent=11 // pred_region
          %p262 = scmp.lt.s32.totalorder %s30, 0
          %s263 = scalar_select %p262, %s30, 0
          %s264 = smul.addr %s263, 8
          %s265 = scalar_lea.vmem %s5, %s264
        $region32: #{_mlm_head_forward.1} parent=11 // pred_fallthru
          _
        // Predicated region
        $region33: #{_mlm_head_forward.1} parent=11 // pred_check
          %p266 = pneg %p194
        $region34: #{_mlm_head_forward.1} parent=11 // pred_check_branch
          %268 = sbr.rel (%p266) target = $region36
        $region35: #{_mlm_head_forward.1} parent=11 // pred_region
          %p269 = scmp.lt.s32.totalorder %s30, 0
          %s270 = scalar_select %p269, %s30, 0
          %s271 = scalar_lea.vmem %s6, %s270
        $region36: #{_mlm_head_forward.1} parent=11 // pred_fallthru
          _
      $region12: #{_mlm_head_forward.1} parent=5 // pred_fallthru
        _
      %p272 = scmp.lt.s32.totalorder %s20, 2
      // Predicated region
      $region37: #{_mlm_head_forward.1} parent=5 // pred_check
        %p273 = pneg %p272
      $region38: #{_mlm_head_forward.1} parent=5 // pred_check_branch
        %275 = sbr.rel (%p273) target = $region40
      $region39: #{_mlm_head_forward.1} parent=5 // pred_region
        // Predicated region
        $region41: #{_mlm_head_forward.1} parent=39 // pred_check
          %p276 = pneg %p52
        $region42: #{_mlm_head_forward.1} parent=39 // pred_check_branch
          %278 = sbr.rel (%p276) target = $region44
        $region43: #{_mlm_head_forward.1} parent=39 // pred_region
          %s279 = sand.u32 %s42, 1
          %s280 = scalar_lea.sflag [#allocation4], %s279
          %s281 = sand.u32 %s42, 1
          %s282 = smul.addr %s281, 8
          %s283 = scalar_lea.vmem [#allocation3], %s282
          %s285 = ssub.s32 128, 128
          %286 = vsyncadd %s280, %s285
          %s287 = smul.addr %s27, 128
          %s288 = scalar_lea.hbm %s0, %s287
          %s290 = sshll.u32 %s283, 4
          %s291 = int_to_ptr.vmem [resolvable:$true] %s290
          %293 = dma.hbm_to_vmem [thread:$0]  %s288, 128, %s291, %s280
        $region44: #{_mlm_head_forward.1} parent=39 // pred_fallthru
          _
      $region40: #{_mlm_head_forward.1} parent=5 // pred_fallthru
        _
      %p294 = scmp.le.s32.totalorder 1, %s20
      %p295 = scmp.lt.s32.totalorder %s20, 3
      %p296 = pnand %p294, %p295
      %p297 = pneg %p296
      // Predicated region
      $region45: #{_mlm_head_forward.1} parent=5 // pred_check
        _
      $region46: #{_mlm_head_forward.1} parent=5 // pred_check_branch
        %299 = sbr.rel (%p296) target = $region48
      $region47: #{_mlm_head_forward.1} parent=5 // pred_region
        %s300 = ssub.s32 %s20, 1
        %s301 = sand.u32 %s45, 1
        %s302 = scalar_lea.sflag [#allocation4], %s301
        %s303 = sand.u32 %s45, 1
        %s304 = smul.addr %s303, 8
        %s305 = scalar_lea.vmem [#allocation3], %s304
        // Predicated region
        $region49: #{_mlm_head_forward.1} parent=47 // pred_check
          %p306 = pneg %p58
        $region50: #{_mlm_head_forward.1} parent=47 // pred_check_branch
          %308 = sbr.rel (%p306) target = $region52
        $region51: #{_mlm_head_forward.1} parent=47 // pred_region
          %309 = dma.done %s302, 128
        $region52: #{_mlm_head_forward.1} parent=47 // pred_fallthru
          _
        // Predicated region
        $region53: #{_mlm_head_forward.1} parent=47 // pred_check
          %p310 = pneg %p79
        $region54: #{_mlm_head_forward.1} parent=47 // pred_check_branch
          %312 = sbr.rel (%p310) target = $region56
        $region55: #{_mlm_head_forward.1} parent=47 // pred_region
          %313 = dma.done [#allocation7], 512
        $region56: #{_mlm_head_forward.1} parent=47 // pred_fallthru
          _
        %s314 = sand.u32 %s45, 1
        %s315 = scalar_lea.sflag [#allocation4], %s314
        %s316 = sand.u32 %s45, 1
        %s317 = smul.addr %s316, 8
        %s318 = scalar_lea.vmem [#allocation3], %s317
        %p319 = pneg %p58
        %p320 = pneg %p55
        %p321 = pneg %p79
        %p322 = pneg %p76
        %p323 = pneg %p100
        %p324 = pneg %p97
        %p325 = pneg %p121
        %p326 = pneg %p118
        %p327 = pneg %p142
        %p328 = pneg %p139
        %p329 = scmp.lt.s32.totalorder %s30, 0
        %s330 = scalar_select %p329, %s30, 0
        %s331 = smul.addr %s330, 8
        %s332 = scalar_lea.vmem %s5, %s331
        %p333 = pneg %p168
        %p334 = pneg %p165
        %p335 = scmp.lt.s32.totalorder %s30, 0
        %s336 = scalar_select %p335, %s30, 0
        %s337 = scalar_lea.vmem %s6, %s336
        %p338 = pneg %p194
        %p339 = pneg %p191
        %p340 = pneg %p222
        %p341 = pneg %p219
        %s342 = sand.u32 %s209, 1
        %s343 = scalar_lea.sflag [#allocation5], %s342
        %s344 = sand.u32 %s209, 1
        %s345 = smul.addr %s344, 8
        %s346 = scalar_lea.vmem [#allocation8], %s345
        %p347 = scmp.lt.s32.totalorder %s30, 0
        %s348 = scalar_select %p347, %s30, 0
        %s349 = smul.addr %s348, 8
        %s350 = scalar_lea.vmem %s5, %s349
        %p351 = scmp.lt.s32.totalorder %s30, 0
        %s352 = scalar_select %p351, %s30, 0
        %s353 = scalar_lea.vmem %s6, %s352
        %p354 = scmp.eq.s32.totalorder %s30, 0
        // Predicated region
        $region57: #{_mlm_head_forward.1} parent=47 // pred_check
          %p355 = pneg %p354
        $region58: #{_mlm_head_forward.1} parent=47 // pred_check_branch
          %357 = sbr.rel (%p355) target = $region60
        $region59: #{_mlm_head_forward.1} parent=47 // pred_region
          %v358 = vld [vmem:[%s305] sm:$0xff]
          %v359 = vld [vmem:[#allocation6] sm:$0xff]
          %v360 = vld [vmem:[#allocation6 + $0x8] sm:$0xff]
          %v361 = vld [vmem:[#allocation6 + $0x10] sm:$0xff]
          %v362 = vld [vmem:[#allocation6 + $0x18] sm:$0xff]
          %v363 = vld [vmem:[%s2] sm:$0x1]
          %v365 = vlaneseq
          %v366 = vshrl.u32 %v365, 7
          %v367 = vsub.s32 0, %v366
          %v368 = vrot.slane %v363, %v367
          %vm370 = vcmask 261120
          %v372 = vsel %vm370, %v358, 0
          %374 = vmatprep.subr.mxu0 0.0
          %375 = vmatpush1.msra.mxu0 %v359
          %376 = vmatprep.subr.mxu0 0.0
          %377 = vmatpush1.msra.mxu0 %v360
          %378 = vmatprep.subr.mxu0 0.0
          %379 = vmatpush1.msra.mxu0 %v361
          %380 = vmatprep.subr.mxu0 0.0
          %381 = vmatpush1.msra.mxu0 %v362
          %382 = vmatprep.subr.mxu0 0.0
          %383 = vmatpush1.msra.mxu0 0.0
          %384 = vmatprep.subr.mxu0 0.0
          %385 = vmatpush1.msra.mxu0 0.0
          %386 = vmatprep.subr.mxu0 0.0
          %387 = vmatpush1.msra.mxu0 0.0
          %388 = vmatprep.subr.mxu0 0.0
          %389 = vmatpush1.msra.mxu0 0.0
          %390 = vmatprep.subr.mxu0 0.0
          %391 = vmatpush1.msra.mxu0 0.0
          %392 = vmatprep.subr.mxu0 0.0
          %393 = vmatpush1.msra.mxu0 0.0
          %394 = vmatprep.subr.mxu0 0.0
          %395 = vmatpush1.msra.mxu0 0.0
          %396 = vmatprep.subr.mxu0 0.0
          %397 = vmatpush1.msra.mxu0 0.0
          %398 = vmatprep.subr.mxu0 0.0
          %399 = vmatpush1.msra.mxu0 0.0
          %400 = vmatprep.subr.mxu0 0.0
          %401 = vmatpush1.msra.mxu0 0.0
          %402 = vmatprep.subr.mxu0 0.0
          %403 = vmatpush1.msra.mxu0 0.0
          %404 = vmatprep.subr.mxu0 0.0
          %405 = vmatpush1.msra.mxu0 0.0
          %406 = vmatprep.subr.mxu0 0.0
          %407 = vmatpush1.msra.mxu0 0.0
          %408 = vmatprep.subr.mxu0 0.0
          %409 = vmatpush1.msra.mxu0 0.0
          %410 = vmatprep.subr.mxu0 0.0
          %411 = vmatpush1.msra.mxu0 0.0
          %412 = vmatprep.subr.mxu0 0.0
          %413 = vmatpush1.msra.mxu0 0.0
          %414 = vmatprep.subr.mxu0 0.0
          %415 = vmatpush1.msra.mxu0 0.0
          %416 = vmatprep.subr.mxu0 0.0
          %417 = vmatpush1.msra.mxu0 0.0
          %418 = vmatprep.subr.mxu0 0.0
          %419 = vmatpush1.msra.mxu0 0.0
          %420 = vmatprep.subr.mxu0 0.0
          %421 = vmatpush1.msra.mxu0 0.0
          %422 = vmatprep.subr.mxu0 0.0
          %423 = vmatpush1.msra.mxu0 0.0
          %424 = vmatprep.subr.mxu0 0.0
          %425 = vmatpush1.msra.mxu0 0.0
          %426 = vmatprep.subr.mxu0 0.0
          %427 = vmatpush1.msra.mxu0 0.0
          %428 = vmatprep.subr.mxu0 0.0
          %429 = vmatpush1.msra.mxu0 0.0
          %430 = vmatprep.subr.mxu0 0.0
          %431 = vmatpush1.msra.mxu0 0.0
          %432 = vmatprep.subr.mxu0 0.0
          %433 = vmatpush1.msra.mxu0 0.0
          %434 = vmatprep.subr.mxu0 0.0
          %435 = vmatpush1.msra.mxu0 0.0
          %436 = vmatprep.subr.mxu0 0.0
          %437 = vmatpush1.msra.mxu0 0.0
          %438 = vmatprep.mubr.f32.mxu0 0.0
          %439 = vmatmul.mubr.f32.gmra.mrb[0].mxu0 %v372
          %v440 = vpop.f32.mrb[0].mxu0
          %v441 = vadd.f32 %v368, %v440
          %v442 = vpop.f32.mrb[0].mxu0
          %443 = vdwg.mxu0
          %v444 = vmul.f32 %v441, 0.5
          %v445 = vmul.f32 %v441, 0.70710677
          %v446 = verf.f32.pop %v445
          %v447 = vadd.f32 %v446, 1.0
          %v448 = vmul.f32 %v444, %v447
          %v449 = vsel %vm370, %v448, 0.0
          %450 = vadd.xlane.f32.xlu0 %v449
          %v451 = vpop.xlane.xlu0 %450
          %v452 = vmul.f32 %v451, 0.03125
          %v453 = vmul.f32 %v448, %v448
          %v454 = vsel %vm370, %v453, 0.0
          %455 = vadd.xlane.f32.xlu0 %v454
          %v456 = vpop.xlane.xlu0 %455
          %v457 = vmul.f32 %v456, 0.03125
          %v458 = vmul.f32 %v452, %v452
          %v459 = vsub.f32 %v457, %v458
          %v460 = vmax.f32 %v459, 0.0
          %v461 = vsub.f32 %v448, %v452
          %v462 = vadd.f32 %v460, 1e-12
          %v463 = vrsqrt.pop %v462
          %v464 = vmul.f32 %v461, %v463
          %v465 = vld [vmem:[%s3] sm:$0x1]
          %v467 = vlaneseq
          %v468 = vshrl.u32 %v467, 7
          %v469 = vsub.s32 0, %v468
          %v470 = vrot.slane %v465, %v469
          %v472 = vmul.f32 %v470, %v464
          %v473 = vld [vmem:[%s4] sm:$0x1]
          %v475 = vlaneseq
          %v476 = vshrl.u32 %v475, 7
          %v477 = vsub.s32 0, %v476
          %v478 = vrot.slane %v473, %v477
          %v480 = vadd.f32 %v472, %v478
          %481 = vst.msk [vmem:[#allocation2] sm:$0xff] %vm370, %v480
        $region60: #{_mlm_head_forward.1} parent=47 // pred_fallthru
          _
        %v482 = vld [vmem:[#allocation2] sm:$0xff]
        %v483 = vld [vmem:[%s350] sm:$0xff]
        %v484 = vld [vmem:[%s350 + $0x8] sm:$0xff]
        %v485 = vld [vmem:[%s350 + $0x10] sm:$0xff]
        %v486 = vld [vmem:[%s350 + $0x18] sm:$0xff]
        %v487 = vld [vmem:[%s353] sm:$0x1]
        %v489 = vlaneseq
        %v490 = vshrl.u32 %v489, 7
        %v491 = vsub.s32 0, %v490
        %v492 = vrot.slane %v487, %v491
        %vm494 = vcmask 261120
        %v496 = vsel %vm494, %v482, 0
        %498 = vmatprep.subr.mxu0 0.0
        %499 = vmatpush1.msra.mxu0 %v483
        %500 = vmatprep.subr.mxu0 0.0
        %501 = vmatpush1.msra.mxu0 %v484
        %502 = vmatprep.subr.mxu0 0.0
        %503 = vmatpush1.msra.mxu0 %v485
        %504 = vmatprep.subr.mxu0 0.0
        %505 = vmatpush1.msra.mxu0 %v486
        %506 = vmatprep.subr.mxu0 0.0
        %507 = vmatpush1.msra.mxu0 0.0
        %508 = vmatprep.subr.mxu0 0.0
        %509 = vmatpush1.msra.mxu0 0.0
        %510 = vmatprep.subr.mxu0 0.0
        %511 = vmatpush1.msra.mxu0 0.0
        %512 = vmatprep.subr.mxu0 0.0
        %513 = vmatpush1.msra.mxu0 0.0
        %514 = vmatprep.subr.mxu0 0.0
        %515 = vmatpush1.msra.mxu0 0.0
        %516 = vmatprep.subr.mxu0 0.0
        %517 = vmatpush1.msra.mxu0 0.0
        %518 = vmatprep.subr.mxu0 0.0
        %519 = vmatpush1.msra.mxu0 0.0
        %520 = vmatprep.subr.mxu0 0.0
        %521 = vmatpush1.msra.mxu0 0.0
        %522 = vmatprep.subr.mxu0 0.0
        %523 = vmatpush1.msra.mxu0 0.0
        %524 = vmatprep.subr.mxu0 0.0
        %525 = vmatpush1.msra.mxu0 0.0
        %526 = vmatprep.subr.mxu0 0.0
        %527 = vmatpush1.msra.mxu0 0.0
        %528 = vmatprep.subr.mxu0 0.0
        %529 = vmatpush1.msra.mxu0 0.0
        %530 = vmatprep.subr.mxu0 0.0
        %531 = vmatpush1.msra.mxu0 0.0
        %532 = vmatprep.subr.mxu0 0.0
        %533 = vmatpush1.msra.mxu0 0.0
        %534 = vmatprep.subr.mxu0 0.0
        %535 = vmatpush1.msra.mxu0 0.0
        %536 = vmatprep.subr.mxu0 0.0
        %537 = vmatpush1.msra.mxu0 0.0
        %538 = vmatprep.subr.mxu0 0.0
        %539 = vmatpush1.msra.mxu0 0.0
        %540 = vmatprep.subr.mxu0 0.0
        %541 = vmatpush1.msra.mxu0 0.0
        %542 = vmatprep.subr.mxu0 0.0
        %543 = vmatpush1.msra.mxu0 0.0
        %544 = vmatprep.subr.mxu0 0.0
        %545 = vmatpush1.msra.mxu0 0.0
        %546 = vmatprep.subr.mxu0 0.0
        %547 = vmatpush1.msra.mxu0 0.0
        %548 = vmatprep.subr.mxu0 0.0
        %549 = vmatpush1.msra.mxu0 0.0
        %550 = vmatprep.subr.mxu0 0.0
        %551 = vmatpush1.msra.mxu0 0.0
        %552 = vmatprep.subr.mxu0 0.0
        %553 = vmatpush1.msra.mxu0 0.0
        %554 = vmatprep.subr.mxu0 0.0
        %555 = vmatpush1.msra.mxu0 0.0
        %556 = vmatprep.subr.mxu0 0.0
        %557 = vmatpush1.msra.mxu0 0.0
        %558 = vmatprep.subr.mxu0 0.0
        %559 = vmatpush1.msra.mxu0 0.0
        %560 = vmatprep.subr.mxu0 0.0
        %561 = vmatpush1.msra.mxu0 0.0
        %562 = vmatprep.mubr.f32.mxu0 0.0
        %563 = vmatmul.mubr.f32.gmra.mrb[0].mxu0 %v496
        %v564 = vpop.f32.mrb[0].mxu0
        %v565 = vadd.f32 %v492, %v564
        %v566 = vpop.f32.mrb[0].mxu0
        %567 = vdwg.mxu0
        %vm568 = vcmask 523264
        %569 = vst.msk [vmem:[%s346] sm:$0xff] %vm568, %v565
        %s570 = sand.u32 %s209, 1
        %s571 = scalar_lea.sflag [#allocation5], %s570
        %s572 = sand.u32 %s209, 1
        %s573 = smul.addr %s572, 8
        %s574 = scalar_lea.vmem [#allocation8], %s573
        // Predicated region
        $region61: #{_mlm_head_forward.1} parent=47 // pred_check
          %p575 = pneg %p219
        $region62: #{_mlm_head_forward.1} parent=47 // pred_check_branch
          %577 = sbr.rel (%p575) target = $region64
        $region63: #{_mlm_head_forward.1} parent=47 // pred_region
          %s579 = ssub.s32 128, 128
          %580 = vsyncadd %s571, %s579
          %s581 = sadd.s32 %s30, %s29
          %s582 = smul.addr %s581, 128
          %s583 = scalar_lea.hbm %s7, %s582
          %s585 = sshll.u32 %s574, 4
          %s586 = int_to_ptr.vmem [resolvable:$true] %s585
          %588 = dma.vmem_to_hbm [thread:$0]  %s586, 128, %s583, %s571
        $region64: #{_mlm_head_forward.1} parent=47 // pred_fallthru
          _
      $region48: #{_mlm_head_forward.1} parent=5 // pred_fallthru
        _
      %p589 = scmp.le.s32.totalorder 2, %s20
      // Predicated region
      $region65: #{_mlm_head_forward.1} parent=5 // pred_check
        %p590 = pneg %p589
      $region66: #{_mlm_head_forward.1} parent=5 // pred_check_branch
        %592 = sbr.rel (%p590) target = $region68
      $region67: #{_mlm_head_forward.1} parent=5 // pred_region
        %s593 = ssub.s32 %s20, 2
        // Predicated region
        $region69: #{_mlm_head_forward.1} parent=67 // pred_check
          %p594 = pneg %p225
        $region70: #{_mlm_head_forward.1} parent=67 // pred_check_branch
          %596 = sbr.rel (%p594) target = $region72
        $region71: #{_mlm_head_forward.1} parent=67 // pred_region
          %s597 = sand.u32 %s210, 1
          %s598 = scalar_lea.sflag [#allocation5], %s597
          %s599 = sand.u32 %s210, 1
          %s600 = smul.addr %s599, 8
          %s601 = scalar_lea.vmem [#allocation8], %s600
          %602 = dma.done %s598, 128
        $region72: #{_mlm_head_forward.1} parent=67 // pred_fallthru
          _
      $region68: #{_mlm_head_forward.1} parent=5 // pred_fallthru
        _
    $region6: #{_mlm_head_forward.1} parent=1 // loop_footer
      %s24 = sadd.s32 1, %s20
    $region7: #{_mlm_head_forward.1} parent=1 // loop_footer_branch
      %19 = sbr.rel target = $region3
    $region8: #{_mlm_head_forward.1} parent=1 // loop_exit
      _
    %603 = vsyncpa [#allocation4], 1
    %s604 = scalar_lea.sflag [#allocation4], 1
    %605 = vsyncpa %s604, 1
    %606 = vsyncpa [#allocation7], 1
    %607 = vsyncpa [#allocation5], 1
    %s608 = scalar_lea.sflag [#allocation5], 1
    %609 = vsyncpa %s608, 1

// kernel: _mlm_head_forward.1
$region0: #{_mlm_head_forward.1}
  #allocation0 [shape = 'u32[]', space=smem, size = 0x4, offset = 0x4, fixed_abs, tag = 'smem constant byte address 0x4 - core index']
  #allocation1 [shape = 'u32[144,128]{1,0:T(1,128)}', space=vmem, size = 0x12000, scoped, tag = 'internal scratch']
  #allocation2 [shape = 'f32[8,32]{1,0:T(8,128)}', space=vmem, size = 0x1000, scoped, tag = 'scratch operand']
  %s0 = inlined_call_operand.hbm [shape: f32[16,32], index: 0, kind: input, shape index: {}]
  %s1 = inlined_call_operand.hbm [shape: f32[32,32], index: 1, kind: input, shape index: {}]
  %s2 = inlined_call_operand.vmem [shape: f32[1,32], index: 2, kind: input, shape index: {}]
  %s3 = inlined_call_operand.vmem [shape: f32[1,32], index: 3, kind: input, shape index: {}]
  %s4 = inlined_call_operand.vmem [shape: f32[1,32], index: 4, kind: input, shape index: {}]
  %s5 = inlined_call_operand.vmem [shape: f32[32,64], index: 5, kind: input, shape index: {}]
  %s6 = inlined_call_operand.vmem [shape: f32[1,64], index: 6, kind: input, shape index: {}]
  %s7 = inlined_call_operand.hbm [shape: f32[16,64], index: 7, kind: output, shape index: {}]
  %s8 = sld [smem:[#allocation0]]
  $region73: #{_mlm_head_forward.1} parent=0
    _
  %s10 = ssub.s32 1, %s8
  %s11 = scalar_select 0, %s10, %s8
  $region1: #{_mlm_head_forward.1} parent=0
    #allocation3 [shape = 'u8[8192]{0}', space=vmem, size = 0x2000, scoped, tag = 'input window, operand 0']
    #allocation4 [shape = 's32[2]{0}', space=sflag, size = 0x8, scoped, tag = 'scoped memory for _mlm_head_forward.1']
    #allocation5 [shape = 's32[2]{0}', space=sflag, size = 0x8, scoped, tag = 'scoped memory for _mlm_head_forward.1']
    #allocation6 [shape = 'u8[16384]{0}', space=vmem, size = 0x4000, scoped, tag = 'input window, operand 1, single buffered']
    #allocation7 [shape = 's32[1]{0}', space=sflag, size = 0x4, scoped, tag = 'scoped memory for _mlm_head_forward.1']
    #allocation8 [shape = 'u8[8192]{0}', space=vmem, size = 0x2000, scoped, tag = 'output window, operand 0']
    %12 = vsyncpa [#allocation4], 0
    %s13 = scalar_lea.sflag [#allocation4], 1
    %14 = vsyncpa %s13, 0
    %15 = vsyncpa [#allocation7], 0
    %16 = vsyncpa [#allocation5], 0
    %s17 = scalar_lea.sflag [#allocation5], 1
    %18 = vsyncpa %s17, 0
    loop: start=0, step=1, limit=4
    $region2: #{_mlm_head_forward.1} parent=1 // loop_pre_header
      _
    $region3: #{_mlm_head_forward.1} parent=1 // loop_header
      %s20 = sphi 0, %s24
      %p21 = scmp.ge.s32.totalorder %s20, 4
      %s27 = sphi 0, %s39
      %s28 = sphi 0, %s35
      %s29 = sphi 0, %s27
      %s30 = sphi 0, %s28
      %s31 = sphi 0, %s29
      %s32 = sphi 0, %s30
      %s42 = sphi 0, %s44
      %s45 = sphi 0, %s42
      %s46 = sphi 0, %s45
      %s62 = sphi 0, %s46
      %s66 = sphi 0, %s66
      %s68 = sphi 0, %s66
      %s69 = sphi 0, %s68
      %s83 = sphi 0, %s69
      %s87 = sphi 0, %s87
      %s89 = sphi 0, %s87
      %s90 = sphi 0, %s89
      %s104 = sphi 0, %s90
      %s108 = sphi 0, %s108
      %s110 = sphi 0, %s108
      %s111 = sphi 0, %s110
      %s125 = sphi 0, %s111
      %s129 = sphi 0, %s129
      %s131 = sphi 0, %s129
      %s132 = sphi 0, %s131
      %s146 = sphi 0, %s132
      %s152 = sphi 0, %s154
      %s155 = sphi 0, %s152
      %s156 = sphi 0, %s155
      %s172 = sphi 0, %s156
      %s178 = sphi 0, %s180
      %s181 = sphi 0, %s178
      %s182 = sphi 0, %s181
      %s198 = sphi 0, %s182
      %s206 = sphi 0, %s208
      %s209 = sphi 0, %s206
      %s210 = sphi 0, %s209
      %s226 = sphi 0, %s210
    $region4: #{_mlm_head_forward.1} parent=1 // loop_header_branch
      %23 = sbr.rel (%p21) target = $region8
    $region5: #{_mlm_head_forward.1} parent=1 // loop_body
      %s25 = ssub.s32 %s20, 1
      %s26 = ssub.s32 %s20, 2
      %s33 = sadd.s32 1, %s28
      %p34 = scmp.ge.s32.totalorder %s33, 1
      %s35 = scalar_select %p34, 0, %s33
      %s36 = sadd.s32 1, %s27
      %s37 = scalar_select %p34, %s36, %s27
      %p38 = scmp.ge.s32.totalorder %s37, 2
      %s39 = scalar_select %p38, 0, %s37
      %s40 = ssub.s32 %s27, %s39
      %p41 = scmp.eq.s32.totalorder %s40, 0
      %s43 = sadd.s32 %s42, 1
      %s44 = scalar_select %p41, %s42, %s43
      %p47 = pneg %p41
      %p48 = scmp.eq.s32.totalorder %s20, 1
      %p49 = por %p47, %p48
      %p50 = scmp.ne.s32.totalorder %s42, %s45
      %p51 = scmp.eq.s32.totalorder %s20, 0
      %p52 = por %p50, %p51
      %p53 = scmp.ne.s32.totalorder %s42, %s45
      %p54 = scmp.eq.s32.totalorder %s25, 1
      %p55 = por %p53, %p54
      %p56 = scmp.ne.s32.totalorder %s45, %s46
      %p57 = scmp.eq.s32.totalorder %s25, 0
      %p58 = por %p56, %p57
      %p59 = scmp.ne.s32.totalorder %s45, %s46
      %p60 = scmp.eq.s32.totalorder %s26, 1
      %p61 = por %p59, %p60
      %p63 = scmp.ne.s32.totalorder %s46, %s62
      %p64 = scmp.eq.s32.totalorder %s26, 0
      %p65 = por %p63, %p64
      %s67 = sadd.s32 %s66, 1
      %p70 = scmp.eq.s32.totalorder %s20, 1
      %p71 = scmp.ne.s32.totalorder %s66, %s68
      %p72 = scmp.eq.s32.totalorder %s20, 0
      %p73 = por %p71, %p72
      %p74 = scmp.ne.s32.totalorder %s66, %s68
      %p75 = scmp.eq.s32.totalorder %s25, 1
      %p76 = por %p74, %p75
      %p77 = scmp.ne.s32.totalorder %s68, %s69
      %p78 = scmp.eq.s32.totalorder %s25, 0
      %p79 = por %p77, %p78
      %p80 = scmp.ne.s32.totalorder %s68, %s69
      %p81 = scmp.eq.s32.totalorder %s26, 1
      %p82 = por %p80, %p81
      %p84 = scmp.ne.s32.totalorder %s69, %s83
      %p85 = scmp.eq.s32.totalorder %s26, 0
      %p86 = por %p84, %p85
      %s88 = sadd.s32 %s87, 1
      %p91 = scmp.eq.s32.totalorder %s20, 1
      %p92 = scmp.ne.s32.totalorder %s87, %s89
      %p93 = scmp.eq.s32.totalorder %s20, 0
      %p94 = por %p92, %p93
      %p95 = scmp.ne.s32.totalorder %s87, %s89
      %p96 = scmp.eq.s32.totalorder %s25, 1
      %p97 = por %p95, %p96
      %p98 = scmp.ne.s32.totalorder %s89, %s90
      %p99 = scmp.eq.s32.totalorder %s25, 0
      %p100 = por %p98, %p99
      %p101 = scmp.ne.s32.totalorder %s89, %s90
      %p102 = scmp.eq.s32.totalorder %s26, 1
      %p103 = por %p101, %p102
      %p105 = scmp.ne.s32.totalorder %s90, %s104
      %p106 = scmp.eq.s32.totalorder %s26, 0
      %p107 = por %p105, %p106
      %s109 = sadd.s32 %s108, 1
      %p112 = scmp.eq.s32.totalorder %s20, 1
      %p113 = scmp.ne.s32.totalorder %s108, %s110
      %p114 = scmp.eq.s32.totalorder %s20, 0
      %p115 = por %p113, %p114
      %p116 = scmp.ne.s32.totalorder %s108, %s110
      %p117 = scmp.eq.s32.totalorder %s25, 1
      %p118 = por %p116, %p117
      %p119 = scmp.ne.s32.totalorder %s110, %s111
      %p120 = scmp.eq.s32.totalorder %s25, 0
      %p121 = por %p119, %p120
      %p122 = scmp.ne.s32.totalorder %s110, %s111
      %p123 = scmp.eq.s32.totalorder %s26, 1
      %p124 = por %p122, %p123
      %p126 = scmp.ne.s32.totalorder %s111, %s125
      %p127 = scmp.eq.s32.totalorder %s26, 0
      %p128 = por %p126, %p127
      %s130 = sadd.s32 %s129, 1
      %p133 = scmp.eq.s32.totalorder %s20, 1
      %p134 = scmp.ne.s32.totalorder %s129, %s131
      %p135 = scmp.eq.s32.totalorder %s20, 0
      %p136 = por %p134, %p135
      %p137 = scmp.ne.s32.totalorder %s129, %s131
      %p138 = scmp.eq.s32.totalorder %s25, 1
      %p139 = por %p137, %p138
      %p140 = scmp.ne.s32.totalorder %s131, %s132
      %p141 = scmp.eq.s32.totalorder %s25, 0
      %p142 = por %p140, %p141
      %p143 = scmp.ne.s32.totalorder %s131, %s132
      %p144 = scmp.eq.s32.totalorder %s26, 1
      %p145 = por %p143, %p144
      %p147 = scmp.ne.s32.totalorder %s132, %s146
      %p148 = scmp.eq.s32.totalorder %s26, 0
      %p149 = por %p147, %p148
      %s150 = ssub.s32 %s28, %s35
      %p151 = scmp.eq.s32.totalorder %s150, 0
      %s153 = sadd.s32 %s152, 1
      %s154 = scalar_select %p151, %s152, %s153
      %p157 = pneg %p151
      %p158 = scmp.eq.s32.totalorder %s20, 1
      %p159 = por %p157, %p158
      %p160 = scmp.ne.s32.totalorder %s152, %s155
      %p161 = scmp.eq.s32.totalorder %s20, 0
      %p162 = por %p160, %p161
      %p163 = scmp.ne.s32.totalorder %s152, %s155
      %p164 = scmp.eq.s32.totalorder %s25, 1
      %p165 = por %p163, %p164
      %p166 = scmp.ne.s32.totalorder %s155, %s156
      %p167 = scmp.eq.s32.totalorder %s25, 0
      %p168 = por %p166, %p167
      %p169 = scmp.ne.s32.totalorder %s155, %s156
      %p170 = scmp.eq.s32.totalorder %s26, 1
      %p171 = por %p169, %p170
      %p173 = scmp.ne.s32.totalorder %s156, %s172
      %p174 = scmp.eq.s32.totalorder %s26, 0
      %p175 = por %p173, %p174
      %s176 = ssub.s32 %s28, %s35
      %p177 = scmp.eq.s32.totalorder %s176, 0
      %s179 = sadd.s32 %s178, 1
      %s180 = scalar_select %p177, %s178, %s179
      %p183 = pneg %p177
      %p184 = scmp.eq.s32.totalorder %s20, 1
      %p185 = por %p183, %p184
      %p186 = scmp.ne.s32.totalorder %s178, %s181
      %p187 = scmp.eq.s32.totalorder %s20, 0
      %p188 = por %p186, %p187
      %p189 = scmp.ne.s32.totalorder %s178, %s181
      %p190 = scmp.eq.s32.totalorder %s25, 1
      %p191 = por %p189, %p190
      %p192 = scmp.ne.s32.totalorder %s181, %s182
      %p193 = scmp.eq.s32.totalorder %s25, 0
      %p194 = por %p192, %p193
      %p195 = scmp.ne.s32.totalorder %s181, %s182
      %p196 = scmp.eq.s32.totalorder %s26, 1
      %p197 = por %p195, %p196
      %p199 = scmp.ne.s32.totalorder %s182, %s198
      %p200 = scmp.eq.s32.totalorder %s26, 0
      %p201 = por %p199, %p200
      %s202 = ssub.s32 %s27, %s39
      %s203 = ssub.s32 %s28, %s35
      %s204 = sor.u32 %s202, %s203
      %p205 = scmp.eq.s32.totalorder %s204, 0
      %s207 = sadd.s32 %s206, 1
      %s208 = scalar_select %p205, %s206, %s207
      %p211 = pneg %p205
      %p212 = scmp.eq.s32.totalorder %s20, 1
      %p213 = por %p211, %p212
      %p214 = scmp.ne.s32.totalorder %s206, %s209
      %p215 = scmp.eq.s32.totalorder %s20, 0
      %p216 = por %p214, %p215
      %p217 = scmp.ne.s32.totalorder %s206, %s209
      %p218 = scmp.eq.s32.totalorder %s25, 1
      %p219 = por %p217, %p218
      %p220 = scmp.ne.s32.totalorder %s209, %s210
      %p221 = scmp.eq.s32.totalorder %s25, 0
      %p222 = por %p220, %p221
      %p223 = scmp.ne.s32.totalorder %s209, %s210
      %p224 = scmp.eq.s32.totalorder %s26, 1
      %p225 = por %p223, %p224
      %p227 = scmp.ne.s32.totalorder %s210, %s226
      %p228 = scmp.eq.s32.totalorder %s26, 0
      %p229 = por %p227, %p228
      %p230 = scmp.le.s32.totalorder 1, %s20
      %p231 = scmp.lt.s32.totalorder %s20, 3
      %p232 = pnand %p230, %p231
      %p233 = pneg %p232
      // Predicated region
      $region9: #{_mlm_head_forward.1} parent=5 // pred_check
        _
      $region10: #{_mlm_head_forward.1} parent=5 // pred_check_branch
        %235 = sbr.rel (%p232) target = $region12
      $region11: #{_mlm_head_forward.1} parent=5 // pred_region
        %s236 = ssub.s32 %s20, 1
        // Predicated region
        $region13: #{_mlm_head_forward.1} parent=11 // pred_check
          %p237 = pneg %p79
        $region14: #{_mlm_head_forward.1} parent=11 // pred_check_branch
          %239 = sbr.rel (%p237) target = $region16
        $region15: #{_mlm_head_forward.1} parent=11 // pred_region
          %s241 = ssub.s32 512, 512
          %242 = vsyncadd [#allocation7], %s241
          %s243 = sshll.u32 [#allocation6], 4
          %s244 = int_to_ptr.vmem [resolvable:$true] %s243
          %249 = dma.hbm_to_vmem [thread:$0]  %s1, 512, %s244, [#allocation7], 128, 128, 8
        $region16: #{_mlm_head_forward.1} parent=11 // pred_fallthru
          _
        // Predicated region
        $region17: #{_mlm_head_forward.1} parent=11 // pred_check
          %p250 = pneg %p100
        $region18: #{_mlm_head_forward.1} parent=11 // pred_check_branch
          %252 = sbr.rel (%p250) target = $region20
        $region19: #{_mlm_head_forward.1} parent=11 // pred_region
          _
        $region20: #{_mlm_head_forward.1} parent=11 // pred_fallthru
          _
        // Predicated region
        $region21: #{_mlm_head_forward.1} parent=11 // pred_check
          %p253 = pneg %p121
        $region22: #{_mlm_head_forward.1} parent=11 // pred_check_branch
          %255 = sbr.rel (%p253) target = $region24
        $region23: #{_mlm_head_forward.1} parent=11 // pred_region
          _
        $region24: #{_mlm_head_forward.1} parent=11 // pred_fallthru
          _
        // Predicated region
        $region25: #{_mlm_head_forward.1} parent=11 // pred_check
          %p256 = pneg %p142
        $region26: #{_mlm_head_forward.1} parent=11 // pred_check_branch
          %258 = sbr.rel (%p256) target = $region28
        $region27: #{_mlm_head_forward.1} parent=11 // pred_region
          _
        $region28: #{_mlm_head_forward.1} parent=11 // pred_fallthru
          _
        // Predicated region
        $region29: #{_mlm_head_forward.1} parent=11 // pred_check
          %p259 = pneg %p168
        $region30: #{_mlm_head_forward.1} parent=11 // pred_check_branch
          %261 = sbr.rel (%p259) target = $region32
        $region31: #{_mlm_head_forward.1} parent=11 // pred_region
          %p262 = scmp.lt.s32.totalorder %s30, 0
          %s263 = scalar_select %p262, %s30, 0
          %s264 = smul.addr %s263, 8
          %s265 = scalar_lea.vmem %s5, %s264
        $region32: #{_mlm_head_forward.1} parent=11 // pred_fallthru
          _
        // Predicated region
        $region33: #{_mlm_head_forward.1} parent=11 // pred_check
          %p266 = pneg %p194
        $region34: #{_mlm_head_forward.1} parent=11 // pred_check_branch
          %268 = sbr.rel (%p266) target = $region36
        $region35: #{_mlm_head_forward.1} parent=11 // pred_region
          %p269 = scmp.lt.s32.totalorder %s30, 0
          %s270 = scalar_select %p269, %s30, 0
          %s271 = scalar_lea.vmem %s6, %s270
        $region36: #{_mlm_head_forward.1} parent=11 // pred_fallthru
          _
      $region12: #{_mlm_head_forward.1} parent=5 // pred_fallthru
        _
      %p272 = scmp.lt.s32.totalorder %s20, 2
      // Predicated region
      $region37: #{_mlm_head_forward.1} parent=5 // pred_check
        %p273 = pneg %p272
      $region38: #{_mlm_head_forward.1} parent=5 // pred_check_branch
        %275 = sbr.rel (%p273) target = $region40
      $region39: #{_mlm_head_forward.1} parent=5 // pred_region
        // Predicated region
        $region41: #{_mlm_head_forward.1} parent=39 // pred_check
          %p276 = pneg %p52
        $region42: #{_mlm_head_forward.1} parent=39 // pred_check_branch
          %278 = sbr.rel (%p276) target = $region44
        $region43: #{_mlm_head_forward.1} parent=39 // pred_region
          %s279 = sand.u32 %s42, 1
          %s280 = scalar_lea.sflag [#allocation4], %s279
          %s281 = sand.u32 %s42, 1
          %s282 = smul.addr %s281, 8
          %s283 = scalar_lea.vmem [#allocation3], %s282
          %s285 = ssub.s32 128, 128
          %286 = vsyncadd %s280, %s285
          %s287 = smul.addr %s27, 128
          %s288 = scalar_lea.hbm %s0, %s287
          %s290 = sshll.u32 %s283, 4
          %s291 = int_to_ptr.vmem [resolvable:$true] %s290
          %293 = dma.hbm_to_vmem [thread:$0]  %s288, 128, %s291, %s280
        $region44: #{_mlm_head_forward.1} parent=39 // pred_fallthru
          _
      $region40: #{_mlm_head_forward.1} parent=5 // pred_fallthru
        _
      %p294 = scmp.le.s32.totalorder 1, %s20
      %p295 = scmp.lt.s32.totalorder %s20, 3
      %p296 = pnand %p294, %p295
      %p297 = pneg %p296
      // Predicated region
      $region45: #{_mlm_head_forward.1} parent=5 // pred_check
        _
      $region46: #{_mlm_head_forward.1} parent=5 // pred_check_branch
        %299 = sbr.rel (%p296) target = $region48
      $region47: #{_mlm_head_forward.1} parent=5 // pred_region
        %s300 = ssub.s32 %s20, 1
        %s301 = sand.u32 %s45, 1
        %s302 = scalar_lea.sflag [#allocation4], %s301
        %s303 = sand.u32 %s45, 1
        %s304 = smul.addr %s303, 8
        %s305 = scalar_lea.vmem [#allocation3], %s304
        // Predicated region
        $region49: #{_mlm_head_forward.1} parent=47 // pred_check
          %p306 = pneg %p58
        $region50: #{_mlm_head_forward.1} parent=47 // pred_check_branch
          %308 = sbr.rel (%p306) target = $region52
        $region51: #{_mlm_head_forward.1} parent=47 // pred_region
          %309 = dma.done %s302, 128
        $region52: #{_mlm_head_forward.1} parent=47 // pred_fallthru
          _
        // Predicated region
        $region53: #{_mlm_head_forward.1} parent=47 // pred_check
          %p310 = pneg %p79
        $region54: #{_mlm_head_forward.1} parent=47 // pred_check_branch
          %312 = sbr.rel (%p310) target = $region56
        $region55: #{_mlm_head_forward.1} parent=47 // pred_region
          %313 = dma.done [#allocation7], 512
        $region56: #{_mlm_head_forward.1} parent=47 // pred_fallthru
          _
        %s314 = sand.u32 %s45, 1
        %s315 = scalar_lea.sflag [#allocation4], %s314
        %s316 = sand.u32 %s45, 1
        %s317 = smul.addr %s316, 8
        %s318 = scalar_lea.vmem [#allocation3], %s317
        %p319 = pneg %p58
        %p320 = pneg %p55
        %p321 = pneg %p79
        %p322 = pneg %p76
        %p323 = pneg %p100
        %p324 = pneg %p97
        %p325 = pneg %p121
        %p326 = pneg %p118
        %p327 = pneg %p142
        %p328 = pneg %p139
        %p329 = scmp.lt.s32.totalorder %s30, 0
        %s330 = scalar_select %p329, %s30, 0
        %s331 = smul.addr %s330, 8
        %s332 = scalar_lea.vmem %s5, %s331
        %p333 = pneg %p168
        %p334 = pneg %p165
        %p335 = scmp.lt.s32.totalorder %s30, 0
        %s336 = scalar_select %p335, %s30, 0
        %s337 = scalar_lea.vmem %s6, %s336
        %p338 = pneg %p194
        %p339 = pneg %p191
        %p340 = pneg %p222
        %p341 = pneg %p219
        %s342 = sand.u32 %s209, 1
        %s343 = scalar_lea.sflag [#allocation5], %s342
        %s344 = sand.u32 %s209, 1
        %s345 = smul.addr %s344, 8
        %s346 = scalar_lea.vmem [#allocation8], %s345
        %p347 = scmp.lt.s32.totalorder %s30, 0
        %s348 = scalar_select %p347, %s30, 0
        %s349 = smul.addr %s348, 8
        %s350 = scalar_lea.vmem %s5, %s349
        %p351 = scmp.lt.s32.totalorder %s30, 0
        %s352 = scalar_select %p351, %s30, 0
        %s353 = scalar_lea.vmem %s6, %s352
        %p354 = scmp.eq.s32.totalorder %s30, 0
        // Predicated region
        $region57: #{_mlm_head_forward.1} parent=47 // pred_check
          %p355 = pneg %p354
        $region58: #{_mlm_head_forward.1} parent=47 // pred_check_branch
          %357 = sbr.rel (%p355) target = $region60
        $region59: #{_mlm_head_forward.1} parent=47 // pred_region
          %v358 = vld [vmem:[%s305] sm:$0xff]
          %v359 = vld [vmem:[#allocation6] sm:$0xff]
          %v360 = vld [vmem:[#allocation6 + $0x8] sm:$0xff]
          %v361 = vld [vmem:[#allocation6 + $0x10] sm:$0xff]
          %v362 = vld [vmem:[#allocation6 + $0x18] sm:$0xff]
          %v363 = vld [vmem:[%s2] sm:$0x1]
          %v365 = vlaneseq
          %v366 = vshrl.u32 %v365, 7
          %v367 = vsub.s32 0, %v366
          %v368 = vrot.slane %v363, %v367
          %vm370 = vcmask 261120
          %v372 = vsel %vm370, %v358, 0
          %374 = vmatprep.subr.mxu0 0.0
          %375 = vmatpush1.msra.mxu0 %v359
          %376 = vmatprep.subr.mxu0 0.0
          %377 = vmatpush1.msra.mxu0 %v360
          %378 = vmatprep.subr.mxu0 0.0
          %379 = vmatpush1.msra.mxu0 %v361
          %380 = vmatprep.subr.mxu0 0.0
          %381 = vmatpush1.msra.mxu0 %v362
          %382 = vmatprep.subr.mxu0 0.0
          %383 = vmatpush1.msra.mxu0 0.0
          %384 = vmatprep.subr.mxu0 0.0
          %385 = vmatpush1.msra.mxu0 0.0
          %386 = vmatprep.subr.mxu0 0.0
          %387 = vmatpush1.msra.mxu0 0.0
          %388 = vmatprep.subr.mxu0 0.0
          %389 = vmatpush1.msra.mxu0 0.0
          %390 = vmatprep.subr.mxu0 0.0
          %391 = vmatpush1.msra.mxu0 0.0
          %392 = vmatprep.subr.mxu0 0.0
          %393 = vmatpush1.msra.mxu0 0.0
          %394 = vmatprep.subr.mxu0 0.0
          %395 = vmatpush1.msra.mxu0 0.0
          %396 = vmatprep.subr.mxu0 0.0
          %397 = vmatpush1.msra.mxu0 0.0
          %398 = vmatprep.subr.mxu0 0.0
          %399 = vmatpush1.msra.mxu0 0.0
          %400 = vmatprep.subr.mxu0 0.0
          %401 = vmatpush1.msra.mxu0 0.0
          %402 = vmatprep.subr.mxu0 0.0
          %403 = vmatpush1.msra.mxu0 0.0
          %404 = vmatprep.subr.mxu0 0.0
          %405 = vmatpush1.msra.mxu0 0.0
          %406 = vmatprep.subr.mxu0 0.0
          %407 = vmatpush1.msra.mxu0 0.0
          %408 = vmatprep.subr.mxu0 0.0
          %409 = vmatpush1.msra.mxu0 0.0
          %410 = vmatprep.subr.mxu0 0.0
          %411 = vmatpush1.msra.mxu0 0.0
          %412 = vmatprep.subr.mxu0 0.0
          %413 = vmatpush1.msra.mxu0 0.0
          %414 = vmatprep.subr.mxu0 0.0
          %415 = vmatpush1.msra.mxu0 0.0
          %416 = vmatprep.subr.mxu0 0.0
          %417 = vmatpush1.msra.mxu0 0.0
          %418 = vmatprep.subr.mxu0 0.0
          %419 = vmatpush1.msra.mxu0 0.0
          %420 = vmatprep.subr.mxu0 0.0
          %421 = vmatpush1.msra.mxu0 0.0
          %422 = vmatprep.subr.mxu0 0.0
          %423 = vmatpush1.msra.mxu0 0.0
          %424 = vmatprep.subr.mxu0 0.0
          %425 = vmatpush1.msra.mxu0 0.0
          %426 = vmatprep.subr.mxu0 0.0
          %427 = vmatpush1.msra.mxu0 0.0
          %428 = vmatprep.subr.mxu0 0.0
          %429 = vmatpush1.msra.mxu0 0.0
          %430 = vmatprep.subr.mxu0 0.0
          %431 = vmatpush1.msra.mxu0 0.0
          %432 = vmatprep.subr.mxu0 0.0
          %433 = vmatpush1.msra.mxu0 0.0
          %434 = vmatprep.subr.mxu0 0.0
          %435 = vmatpush1.msra.mxu0 0.0
          %436 = vmatprep.subr.mxu0 0.0
          %437 = vmatpush1.msra.mxu0 0.0
          %438 = vmatprep.mubr.f32.mxu0 0.0
          %439 = vmatmul.mubr.f32.gmra.mrb[0].mxu0 %v372
          %v440 = vpop.f32.mrb[0].mxu0
          %v441 = vadd.f32 %v368, %v440
          %v442 = vpop.f32.mrb[0].mxu0
          %443 = vdwg.mxu0
          %v444 = vmul.f32 %v441, 0.5
          %v445 = vmul.f32 %v441, 0.70710677
          %v446 = verf.f32.pop %v445
          %v447 = vadd.f32 %v446, 1.0
          %v448 = vmul.f32 %v444, %v447
          %v449 = vsel %vm370, %v448, 0.0
          %450 = vadd.xlane.f32.xlu0 %v449
          %v451 = vpop.xlane.xlu0 %450
          %v452 = vmul.f32 %v451, 0.03125
          %v453 = vmul.f32 %v448, %v448
          %v454 = vsel %vm370, %v453, 0.0
          %455 = vadd.xlane.f32.xlu0 %v454
          %v456 = vpop.xlane.xlu0 %455
          %v457 = vmul.f32 %v456, 0.03125
          %v458 = vmul.f32 %v452, %v452
          %v459 = vsub.f32 %v457, %v458
          %v460 = vmax.f32 %v459, 0.0
          %v461 = vsub.f32 %v448, %v452
          %v462 = vadd.f32 %v460, 1e-12
          %v463 = vrsqrt.pop %v462
          %v464 = vmul.f32 %v461, %v463
          %v465 = vld [vmem:[%s3] sm:$0x1]
          %v467 = vlaneseq
          %v468 = vshrl.u32 %v467, 7
          %v469 = vsub.s32 0, %v468
          %v470 = vrot.slane %v465, %v469
          %v472 = vmul.f32 %v470, %v464
          %v473 = vld [vmem:[%s4] sm:$0x1]
          %v475 = vlaneseq
          %v476 = vshrl.u32 %v475, 7
          %v477 = vsub.s32 0, %v476
          %v478 = vrot.slane %v473, %v477
          %v480 = vadd.f32 %v472, %v478
          %481 = vst.msk [vmem:[#allocation2] sm:$0xff] %vm370, %v480
        $region60: #{_mlm_head_forward.1} parent=47 // pred_fallthru
          _
        %v482 = vld [vmem:[#allocation2] sm:$0xff]
        %v483 = vld [vmem:[%s350] sm:$0xff]
        %v484 = vld [vmem:[%s350 + $0x8] sm:$0xff]
        %v485 = vld [vmem:[%s350 + $0x10] sm:$0xff]
        %v486 = vld [vmem:[%s350 + $0x18] sm:$0xff]
        %v487 = vld [vmem:[%s353] sm:$0x1]
        %v489 = vlaneseq
        %v490 = vshrl.u32 %v489, 7
        %v491 = vsub.s32 0, %v490
        %v492 = vrot.slane %v487, %v491
        %vm494 = vcmask 261120
        %v496 = vsel %vm494, %v482, 0
        %498 = vmatprep.subr.mxu0 0.0
        %499 = vmatpush1.msra.mxu0 %v483
        %500 = vmatprep.subr.mxu0 0.0
        %501 = vmatpush1.msra.mxu0 %v484
        %502 = vmatprep.subr.mxu0 0.0
        %503 = vmatpush1.msra.mxu0 %v485
        %504 = vmatprep.subr.mxu0 0.0
        %505 = vmatpush1.msra.mxu0 %v486
        %506 = vmatprep.subr.mxu0 0.0
        %507 = vmatpush1.msra.mxu0 0.0
        %508 = vmatprep.subr.mxu0 0.0
        %509 = vmatpush1.msra.mxu0 0.0
        %510 = vmatprep.subr.mxu0 0.0
        %511 = vmatpush1.msra.mxu0 0.0
        %512 = vmatprep.subr.mxu0 0.0
        %513 = vmatpush1.msra.mxu0 0.0
        %514 = vmatprep.subr.mxu0 0.0
        %515 = vmatpush1.msra.mxu0 0.0
        %516 = vmatprep.subr.mxu0 0.0
        %517 = vmatpush1.msra.mxu0 0.0
        %518 = vmatprep.subr.mxu0 0.0
        %519 = vmatpush1.msra.mxu0 0.0
        %520 = vmatprep.subr.mxu0 0.0
        %521 = vmatpush1.msra.mxu0 0.0
        %522 = vmatprep.subr.mxu0 0.0
        %523 = vmatpush1.msra.mxu0 0.0
        %524 = vmatprep.subr.mxu0 0.0
        %525 = vmatpush1.msra.mxu0 0.0
        %526 = vmatprep.subr.mxu0 0.0
        %527 = vmatpush1.msra.mxu0 0.0
        %528 = vmatprep.subr.mxu0 0.0
        %529 = vmatpush1.msra.mxu0 0.0
        %530 = vmatprep.subr.mxu0 0.0
        %531 = vmatpush1.msra.mxu0 0.0
        %532 = vmatprep.subr.mxu0 0.0
        %533 = vmatpush1.msra.mxu0 0.0
        %534 = vmatprep.subr.mxu0 0.0
        %535 = vmatpush1.msra.mxu0 0.0
        %536 = vmatprep.subr.mxu0 0.0
        %537 = vmatpush1.msra.mxu0 0.0
        %538 = vmatprep.subr.mxu0 0.0
        %539 = vmatpush1.msra.mxu0 0.0
        %540 = vmatprep.subr.mxu0 0.0
        %541 = vmatpush1.msra.mxu0 0.0
        %542 = vmatprep.subr.mxu0 0.0
        %543 = vmatpush1.msra.mxu0 0.0
        %544 = vmatprep.subr.mxu0 0.0
        %545 = vmatpush1.msra.mxu0 0.0
        %546 = vmatprep.subr.mxu0 0.0
        %547 = vmatpush1.msra.mxu0 0.0
        %548 = vmatprep.subr.mxu0 0.0
        %549 = vmatpush1.msra.mxu0 0.0
        %550 = vmatprep.subr.mxu0 0.0
        %551 = vmatpush1.msra.mxu0 0.0
        %552 = vmatprep.subr.mxu0 0.0
        %553 = vmatpush1.msra.mxu0 0.0
        %554 = vmatprep.subr.mxu0 0.0
        %555 = vmatpush1.msra.mxu0 0.0
        %556 = vmatprep.subr.mxu0 0.0
        %557 = vmatpush1.msra.mxu0 0.0
        %558 = vmatprep.subr.mxu0 0.0
        %559 = vmatpush1.msra.mxu0 0.0
        %560 = vmatprep.subr.mxu0 0.0
        %561 = vmatpush1.msra.mxu0 0.0
        %562 = vmatprep.mubr.f32.mxu0 0.0
        %563 = vmatmul.mubr.f32.gmra.mrb[0].mxu0 %v496
        %v564 = vpop.f32.mrb[0].mxu0
        %v565 = vadd.f32 %v492, %v564
        %v566 = vpop.f32.mrb[0].mxu0
        %567 = vdwg.mxu0
        %vm568 = vcmask 523264
        %569 = vst.msk [vmem:[%s346] sm:$0xff] %vm568, %v565
        %s570 = sand.u32 %s209, 1
        %s571 = scalar_lea.sflag [#allocation5], %s570
        %s572 = sand.u32 %s209, 1
        %s573 = smul.addr %s572, 8
        %s574 = scalar_lea.vmem [#allocation8], %s573
        // Predicated region
        $region61: #{_mlm_head_forward.1} parent=47 // pred_check
          %p575 = pneg %p219
        $region62: #{_mlm_head_forward.1} parent=47 // pred_check_branch
          %577 = sbr.rel (%p575) target = $region64
        $region63: #{_mlm_head_forward.1} parent=47 // pred_region
          %s579 = ssub.s32 128, 128
          %580 = vsyncadd %s571, %s579
          %s581 = sadd.s32 %s30, %s29
          %s582 = smul.addr %s581, 128
          %s583 = scalar_lea.hbm %s7, %s582
          %s585 = sshll.u32 %s574, 4
          %s586 = int_to_ptr.vmem [resolvable:$true] %s585
          %588 = dma.vmem_to_hbm [thread:$0]  %s586, 128, %s583, %s571
        $region64: #{_mlm_head_forward.1} parent=47 // pred_fallthru
          _
      $region48: #{_mlm_head_forward.1} parent=5 // pred_fallthru
        _
      %p589 = scmp.le.s32.totalorder 2, %s20
      // Predicated region
      $region65: #{_mlm_head_forward.1} parent=5 // pred_check
        %p590 = pneg %p589
      $region66: #{_mlm_head_forward.1} parent=5 // pred_check_branch
        %592 = sbr.rel (%p590) target = $region68
      $region67: #{_mlm_head_forward.1} parent=5 // pred_region
        %s593 = ssub.s32 %s20, 2
        // Predicated region
        $region69: #{_mlm_head_forward.1} parent=67 // pred_check
          %p594 = pneg %p225
        $region70: #{_mlm_head_forward.1} parent=67 // pred_check_branch
          %596 = sbr.rel (%p594) target = $region72
        $region71: #{_mlm_head_forward.1} parent=67 // pred_region
          %s597 = sand.u32 %s210, 1
          %s598 = scalar_lea.sflag [#allocation5], %s597
          %s599 = sand.u32 %s210, 1
          %s600 = smul.addr %s599, 8
          %s601 = scalar_lea.vmem [#allocation8], %s600
          %602 = dma.done %s598, 128
        $region72: #{_mlm_head_forward.1} parent=67 // pred_fallthru
          _
      $region68: #{_mlm_head_forward.1} parent=5 // pred_fallthru
        _
    $region6: #{_mlm_head_forward.1} parent=1 // loop_footer
      %s24 = sadd.s32 1, %s20
    $region7: #{_mlm_head_forward.1} parent=1 // loop_footer_branch
      %19 = sbr.rel target = $region3
    $region8: #{_mlm_head_forward.1} parent=1 // loop_exit
      _
    %603 = vsyncpa [#allocation4], 1
    %s604 = scalar_lea.sflag [#allocation4], 1
    %605 = vsyncpa %s604, 1
    %606 = vsyncpa [#allocation7], 1
    %607 = vsyncpa [#allocation5], 1
    %s608 = scalar_lea.sflag [#allocation5], 1
    %609 = vsyncpa %s608, 1

</llo_original>
